<compile_context>
chip_gen: v6e
topology: v6e:2x2x1
jax: 0.10.0
libtpu: 0.0.40
codegen_flags: <defaults>
</compile_context>

<pallas_src>
import jax
import jax.numpy as jnp
from jax import lax
from jax.experimental import pallas as pl
from jax.experimental.pallas import tpu as pltpu


def _gru_bidir_kernel(gi_ref, whT_ref, bhh_ref, h0_ref, y_ref, hn_ref, h_sc):
    """Fused bidirectional GRU recurrence.

    grid = (2, NT): axis 0 = direction ("parallel"), axis 1 = time chunk
    ("arbitrary", sequential).  Kernel-visible blocks (direction squeezed):
      gi_ref : (K, B, 3H)  precomputed x_t @ W_ih^T + b_ih for this chunk
      whT_ref: (H, 3H)     W_hh^T for this direction (resident)
      bhh_ref: (1, 3H)
      h0_ref : (B, H)
      y_ref  : (K, B, H)
      hn_ref : (B, H)      final hidden state (written on the last chunk)
      h_sc   : (2, B, H)   f32 hidden-state scratch, one slot per direction
    """
    d = pl.program_id(0)
    c = pl.program_id(1)
    nc = pl.num_programs(1)
    K = gi_ref.shape[0]
    H = hn_ref.shape[-1]

    whT = whT_ref[...]          # keep storage dtype (f32, or bf16 if requested)
    bhh = bhh_ref[...]          # (1, 3H) f32

    def cell(gi, h):
        # h @ W_hh^T on the MXU (f32 accumulation), gates on VPU/EUP in f32.
        gh = jnp.dot(h.astype(whT.dtype), whT,
                     preferred_element_type=jnp.float32) + bhh
        r = jax.nn.sigmoid(gi[:, :H] + gh[:, :H])
        z = jax.nn.sigmoid(gi[:, H:2 * H] + gh[:, H:2 * H])
        n = jnp.tanh(gi[:, 2 * H:] + r * gh[:, 2 * H:])
        return (1.0 - z) * n + z * h

    def run(slot, reverse):
        @pl.when(c == 0)
        def _init():
            h_sc[slot] = h0_ref[...].astype(jnp.float32)

        h = h_sc[slot]
        steps = range(K - 1, -1, -1) if reverse else range(K)
        for k in steps:                       # fully unrolled, static indices
            h = cell(gi_ref[k].astype(jnp.float32), h)
            y_ref[k] = h.astype(y_ref.dtype)
        h_sc[slot] = h

        @pl.when(c == nc - 1)
        def _final():
            hn_ref[...] = h.astype(hn_ref.dtype)

    # Two statically-unrolled code paths so every Ref index stays static.
    @pl.when(d == 0)
    def _fwd():
        run(0, reverse=False)

    @pl.when(d != 0)
    def _bwd():
        run(1, reverse=True)


def encoder_forward(x, params, hidden=None, *, time_chunk=None, mxu_dtype=None):
    """Bidirectional single-layer GRU (== PyTorch Encoder.forward).

    x      : (T, B, E)   (seq_len, batch, embedding_dim), batch_first=False
    hidden : optional (2, B, H) initial hidden state (default zeros)
    returns: y (T, B, 2H)  [forward ++ backward], h_n (2, B, H)
    """
    T, B, E = x.shape
    H = params["w_hh_f"].shape[1]

    if time_chunk is None:
        time_chunk = next(k for k in (8, 4, 2, 1) if T % k == 0)
    assert T % time_chunk == 0, "time_chunk must divide seq_len"
    K = time_chunk
    NT = T // K

    f32 = jnp.float32
    cdt = x.dtype if mxu_dtype is None else mxu_dtype   # MXU operand dtype

    # ---- hoisted, time-parallel input projection (both directions at once) ----
    wiT = jnp.stack([params["w_ih_f"].T, params["w_ih_b"].T], 0).astype(cdt)  # (2,E,3H)
    bih = jnp.stack([params["b_ih_f"], params["b_ih_b"]], 0).astype(f32)      # (2,3H)
    gi = jnp.einsum("tbe,dek->dtbk", x.astype(cdt), wiT,
                    preferred_element_type=f32) + bih[:, None, None, :]       # (2,T,B,3H)

    whT = jnp.stack([params["w_hh_f"].T, params["w_hh_b"].T], 0).astype(cdt)  # (2,H,3H)
    bhh = jnp.stack([params["b_hh_f"], params["b_hh_b"]],
                    0).reshape(2, 1, 3 * H).astype(f32)                       # (2,1,3H)

    if hidden is None:
        h0 = jnp.zeros((2, B, H), f32)
    else:
        h0 = jnp.asarray(hidden).astype(f32)

    def t_idx(d, c):
        # forward direction: chunk c; backward direction: chunk NT-1-c
        return c * (1 - d) + (NT - 1 - c) * d

    y2, h_n = pl.pallas_call(
        _gru_bidir_kernel,
        out_shape=(jax.ShapeDtypeStruct((2, T, B, H), x.dtype),
                   jax.ShapeDtypeStruct((2, B, H), x.dtype)),
        grid_spec=pltpu.PrefetchScalarGridSpec(
            num_scalar_prefetch=0,
            grid=(2, NT),
            in_specs=[
                pl.BlockSpec((None, K, B, 3 * H),
                             lambda d, c: (d, t_idx(d, c), 0, 0)),        # gi chunk
                pl.BlockSpec((None, H, 3 * H), lambda d, c: (d, 0, 0)),   # W_hh^T
                pl.BlockSpec((None, 1, 3 * H), lambda d, c: (d, 0, 0)),   # b_hh
                pl.BlockSpec((None, B, H), lambda d, c: (d, 0, 0)),       # h0
            ],
            out_specs=[
                pl.BlockSpec((None, K, B, H),
                             lambda d, c: (d, t_idx(d, c), 0, 0)),        # y chunk
                pl.BlockSpec((None, B, H), lambda d, c: (d, 0, 0)),       # h_n
            ],
            scratch_shapes=[pltpu.VMEM((2, B, H), jnp.float32)],
        ),
        # Direction axis -> both TensorCores on v7x; time axis is sequential.
        # (For production sizes also set vmem_limit_bytes and mxu_dtype=bf16.)
        compiler_params=pltpu.CompilerParams(
            dimension_semantics=("parallel", "arbitrary")),
    )(gi, whT, bhh, h0)

    y = jnp.concatenate([y2[0], y2[1]], axis=-1)        # (T, B, 2H) [fwd ++ bwd]
    return y, h_n


# ------------------------- pure-JAX reference -------------------------------
def _ref_gru_dir(x, w_ih, w_hh, b_ih, b_hh, h0):
    H = w_hh.shape[1]

    def step(h, xt):
        gi = xt @ w_ih.T + b_ih
        gh = h @ w_hh.T + b_hh
        r = jax.nn.sigmoid(gi[:, :H] + gh[:, :H])
        z = jax.nn.sigmoid(gi[:, H:2 * H] + gh[:, H:2 * H])
        n = jnp.tanh(gi[:, 2 * H:] + r * gh[:, 2 * H:])
        h_new = (1.0 - z) * n + z * h
        return h_new, h_new

    hN, ys = lax.scan(step, h0, x)
    return ys, hN


def _ref_encoder(x, params):
    T, B, _ = x.shape
    H = params["w_hh_f"].shape[1]
    h0 = jnp.zeros((B, H), x.dtype)
    y_f, hn_f = _ref_gru_dir(x, params["w_ih_f"], params["w_hh_f"],
                             params["b_ih_f"], params["b_hh_f"], h0)
    y_b, hn_b = _ref_gru_dir(jnp.flip(x, 0), params["w_ih_b"], params["w_hh_b"],
                             params["b_ih_b"], params["b_hh_b"], h0)
    y = jnp.concatenate([y_f, jnp.flip(y_b, 0)], axis=-1)
    return y, jnp.stack([hn_f, hn_b], axis=0)


# ------------------------------ main ----------------------------------------
if __name__ == "__main__":
    T, B, E, H = 8, 2, 16, 32          # seq, batch, embedding_dim, hidden_dim
    key = jax.random.PRNGKey(0)
    keys = jax.random.split(key, 9)
    k = 1.0 / jnp.sqrt(jnp.float32(H))  # PyTorch GRU init range

    def u(kk, shape):
        return jax.random.uniform(kk, shape, jnp.float32, -k, k)

    params = {
        "w_ih_f": u(keys[0], (3 * H, E)),
        "w_hh_f": u(keys[1], (3 * H, H)),
        "b_ih_f": u(keys[2], (3 * H,)),
        "b_hh_f": u(keys[3], (3 * H,)),
        "w_ih_b": u(keys[4], (3 * H, E)),
        "w_hh_b": u(keys[5], (3 * H, H)),
        "b_ih_b": u(keys[6], (3 * H,)),
        "b_hh_b": u(keys[7], (3 * H,)),
    }

    x = jax.random.normal(keys[8], (T, B, E), jnp.float32)

    y_ref, h_ref = _ref_encoder(x, params)

    # Exercise both the multi-chunk (NT=2, reversed-chunk mapping) and the
    # single-chunk (grid collapsed over time) paths.
    for chunk in (4, None):
        y, h_n = encoder_forward(x, params, hidden=None, time_chunk=chunk)
        jax.block_until_ready((y, h_n))
        assert y.shape == (T, B, 2 * H) and h_n.shape == (2, B, H)
        assert jnp.allclose(y, y_ref, atol=1e-4, rtol=1e-4)
        assert jnp.allclose(h_n, h_ref, atol=1e-4, rtol=1e-4)

    print("KERNEL_OK")
</pallas_src>

<mosaic_0001>
module attributes {stable_mosaic.version = 11 : i64} {
  func.func @_gru_bidir_kernel(%arg0: i32, %arg1: i32, %arg2: memref<1x4x2x96xf32, #tpu.memory_space<vmem>>, %arg3: memref<1x32x96xf32, #tpu.memory_space<vmem>>, %arg4: memref<1x1x96xf32, #tpu.memory_space<vmem>>, %arg5: memref<1x2x32xf32, #tpu.memory_space<vmem>>, %arg6: memref<1x4x2x32xf32, #tpu.memory_space<vmem>>, %arg7: memref<1x2x32xf32, #tpu.memory_space<vmem>>, %arg8: memref<2x2x32xf32, #tpu.memory_space<vmem>>) attributes {dimension_semantics = [#tpu.dimension_semantics<parallel>, #tpu.dimension_semantics<arbitrary>], iteration_bounds = array<i64: 2, 2>, scalar_prefetch = 0 : i64, scratch_operands = 1 : i64, tpu.core_type = #tpu.core_type<tc>, window_params = [{transform_indices = @transform_0, window_bounds = array<i64: 1, 4, 2, 96>}, {transform_indices = @transform_1, window_bounds = array<i64: 1, 32, 96>}, {transform_indices = @transform_2, window_bounds = array<i64: 1, 1, 96>}, {transform_indices = @transform_3, window_bounds = array<i64: 1, 2, 32>}, {transform_indices = @transform_4, window_bounds = array<i64: 1, 4, 2, 32>}, {transform_indices = @transform_5, window_bounds = array<i64: 1, 2, 32>}]} {
    %c0 = arith.constant 0 : index
    %c0_0 = arith.constant 0 : index
    %c0_1 = arith.constant 0 : index
    %0 = vector.load %arg3[%c0, %c0_0, %c0_1] : memref<1x32x96xf32, #tpu.memory_space<vmem>>, vector<1x32x96xf32>
    %1 = vector.shape_cast %0 : vector<1x32x96xf32> to vector<32x96xf32>
    %c0_2 = arith.constant 0 : index
    %c0_3 = arith.constant 0 : index
    %c0_4 = arith.constant 0 : index
    %2 = vector.load %arg4[%c0_2, %c0_3, %c0_4] : memref<1x1x96xf32, #tpu.memory_space<vmem>>, vector<1x1x96xf32>
    %3 = vector.shape_cast %2 : vector<1x1x96xf32> to vector<1x96xf32>
    %c0_i32 = arith.constant 0 : i32
    %4 = arith.cmpi eq, %arg0, %c0_i32 : i32
    %5 = arith.extui %4 : i1 to i32
    %c0_i32_5 = arith.constant 0 : i32
    %6 = arith.cmpi ne, %5, %c0_i32_5 : i32
    scf.if %6 {
      %c0_i32_8 = arith.constant 0 : i32
      %10 = arith.cmpi eq, %arg1, %c0_i32_8 : i32
      %11 = arith.extui %10 : i1 to i32
      %c0_i32_9 = arith.constant 0 : i32
      %12 = arith.cmpi ne, %11, %c0_i32_9 : i32
      scf.if %12 {
        %c0_61 = arith.constant 0 : index
        %c0_62 = arith.constant 0 : index
        %c0_63 = arith.constant 0 : index
        %157 = vector.load %arg5[%c0_61, %c0_62, %c0_63] : memref<1x2x32xf32, #tpu.memory_space<vmem>>, vector<1x2x32xf32>
        %158 = vector.shape_cast %157 : vector<1x2x32xf32> to vector<2x32xf32>
        %c0_64 = arith.constant 0 : index
        %c0_65 = arith.constant 0 : index
        %c0_66 = arith.constant 0 : index
        %159 = vector.load %arg8[%c0_64, %c0_65, %c0_66] : memref<2x2x32xf32, #tpu.memory_space<vmem>>, vector<1x2x32xf32>
        %160 = vector.shape_cast %159 : vector<1x2x32xf32> to vector<2x32xf32>
        %161 = vector.shape_cast %158 : vector<2x32xf32> to vector<1x2x32xf32>
        tpu.vector_store %arg8[%c0_64, %c0_65, %c0_66], %161 {strides = array<i32>} : memref<2x2x32xf32, #tpu.memory_space<vmem>>, vector<1x2x32xf32>,
      } else {
      }
      %c0_10 = arith.constant 0 : index
      %c0_11 = arith.constant 0 : index
      %c0_12 = arith.constant 0 : index
      %13 = vector.load %arg8[%c0_10, %c0_11, %c0_12] : memref<2x2x32xf32, #tpu.memory_space<vmem>>, vector<1x2x32xf32>
      %14 = vector.shape_cast %13 : vector<1x2x32xf32> to vector<2x32xf32>
      %c0_13 = arith.constant 0 : index
      %c0_14 = arith.constant 0 : index
      %c0_15 = arith.constant 0 : index
      %c0_16 = arith.constant 0 : index
      %15 = vector.load %arg2[%c0_13, %c0_14, %c0_15, %c0_16] : memref<1x4x2x96xf32, #tpu.memory_space<vmem>>, vector<1x1x2x96xf32>
      %16 = vector.shape_cast %15 : vector<1x1x2x96xf32> to vector<2x96xf32>
      %cst = arith.constant dense<0.000000e+00> : vector<2x96xf32>
      %17 = tpu.matmul %14, %1, %cst {dimension_numbers = #tpu.dot_dimension_numbers<[1], [0], [0], [1], [0, 0, 1, 1], [], []>} : vector<2x32xf32>, vector<32x96xf32>, vector<2x96xf32> -> vector<2x96xf32>
      %18 = vector.broadcast %3 : vector<1x96xf32> to vector<2x96xf32>
      %19 = arith.addf %17, %18 : vector<2x96xf32>
      %20 = vector.extract_strided_slice %16 {offsets = [0, 0], sizes = [2, 32], strides = [1, 1]} : vector<2x96xf32> to vector<2x32xf32>
      %21 = vector.extract_strided_slice %19 {offsets = [0, 0], sizes = [2, 32], strides = [1, 1]} : vector<2x96xf32> to vector<2x32xf32>
      %22 = arith.addf %20, %21 : vector<2x32xf32>
      %23 = arith.negf %22 : vector<2x32xf32>
      %24 = math.exp %23 : vector<2x32xf32>
      %cst_17 = arith.constant 1.000000e+00 : f32
      %25 = vector.broadcast %cst_17 : f32 to vector<2x32xf32>
      %26 = arith.addf %25, %24 : vector<2x32xf32>
      %27 = arith.divf %25, %26 : vector<2x32xf32>
      %28 = vector.extract_strided_slice %16 {offsets = [0, 32], sizes = [2, 32], strides = [1, 1]} : vector<2x96xf32> to vector<2x32xf32>
      %29 = vector.extract_strided_slice %19 {offsets = [0, 32], sizes = [2, 32], strides = [1, 1]} : vector<2x96xf32> to vector<2x32xf32>
      %30 = arith.addf %28, %29 : vector<2x32xf32>
      %31 = arith.negf %30 : vector<2x32xf32>
      %32 = math.exp %31 : vector<2x32xf32>
      %cst_18 = arith.constant 1.000000e+00 : f32
      %33 = vector.broadcast %cst_18 : f32 to vector<2x32xf32>
      %34 = arith.addf %33, %32 : vector<2x32xf32>
      %35 = arith.divf %33, %34 : vector<2x32xf32>
      %36 = vector.extract_strided_slice %16 {offsets = [0, 64], sizes = [2, 32], strides = [1, 1]} : vector<2x96xf32> to vector<2x32xf32>
      %37 = vector.extract_strided_slice %19 {offsets = [0, 64], sizes = [2, 32], strides = [1, 1]} : vector<2x96xf32> to vector<2x32xf32>
      %38 = arith.mulf %27, %37 : vector<2x32xf32>
      %39 = arith.addf %36, %38 : vector<2x32xf32>
      %40 = math.tanh %39 : vector<2x32xf32>
      %cst_19 = arith.constant 1.000000e+00 : f32
      %41 = vector.broadcast %cst_19 : f32 to vector<2x32xf32>
      %42 = arith.subf %41, %35 : vector<2x32xf32>
      %43 = arith.mulf %42, %40 : vector<2x32xf32>
      %44 = arith.mulf %35, %14 : vector<2x32xf32>
      %45 = arith.addf %43, %44 : vector<2x32xf32>
      %c0_20 = arith.constant 0 : index
      %c0_21 = arith.constant 0 : index
      %c0_22 = arith.constant 0 : index
      %c0_23 = arith.constant 0 : index
      %46 = vector.load %arg6[%c0_20, %c0_21, %c0_22, %c0_23] : memref<1x4x2x32xf32, #tpu.memory_space<vmem>>, vector<1x1x2x32xf32>
      %47 = vector.shape_cast %46 : vector<1x1x2x32xf32> to vector<2x32xf32>
      %48 = vector.shape_cast %45 : vector<2x32xf32> to vector<1x1x2x32xf32>
      tpu.vector_store %arg6[%c0_20, %c0_21, %c0_22, %c0_23], %48 {strides = array<i32>} : memref<1x4x2x32xf32, #tpu.memory_space<vmem>>, vector<1x1x2x32xf32>,
      %c0_24 = arith.constant 0 : index
      %c1 = arith.constant 1 : index
      %c0_25 = arith.constant 0 : index
      %c0_26 = arith.constant 0 : index
      %49 = vector.load %arg2[%c0_24, %c1, %c0_25, %c0_26] : memref<1x4x2x96xf32, #tpu.memory_space<vmem>>, vector<1x1x2x96xf32>
      %50 = vector.shape_cast %49 : vector<1x1x2x96xf32> to vector<2x96xf32>
      %cst_27 = arith.constant dense<0.000000e+00> : vector<2x96xf32>
      %51 = tpu.matmul %45, %1, %cst_27 {dimension_numbers = #tpu.dot_dimension_numbers<[1], [0], [0], [1], [0, 0, 1, 1], [], []>} : vector<2x32xf32>, vector<32x96xf32>, vector<2x96xf32> -> vector<2x96xf32>
      %52 = vector.broadcast %3 : vector<1x96xf32> to vector<2x96xf32>
      %53 = arith.addf %51, %52 : vector<2x96xf32>
      %54 = vector.extract_strided_slice %50 {offsets = [0, 0], sizes = [2, 32], strides = [1, 1]} : vector<2x96xf32> to vector<2x32xf32>
      %55 = vector.extract_strided_slice %53 {offsets = [0, 0], sizes = [2, 32], strides = [1, 1]} : vector<2x96xf32> to vector<2x32xf32>
      %56 = arith.addf %54, %55 : vector<2x32xf32>
      %57 = arith.negf %56 : vector<2x32xf32>
      %58 = math.exp %57 : vector<2x32xf32>
      %cst_28 = arith.constant 1.000000e+00 : f32
      %59 = vector.broadcast %cst_28 : f32 to vector<2x32xf32>
      %60 = arith.addf %59, %58 : vector<2x32xf32>
      %61 = arith.divf %59, %60 : vector<2x32xf32>
      %62 = vector.extract_strided_slice %50 {offsets = [0, 32], sizes = [2, 32], strides = [1, 1]} : vector<2x96xf32> to vector<2x32xf32>
      %63 = vector.extract_strided_slice %53 {offsets = [0, 32], sizes = [2, 32], strides = [1, 1]} : vector<2x96xf32> to vector<2x32xf32>
      %64 = arith.addf %62, %63 : vector<2x32xf32>
      %65 = arith.negf %64 : vector<2x32xf32>
      %66 = math.exp %65 : vector<2x32xf32>
      %cst_29 = arith.constant 1.000000e+00 : f32
      %67 = vector.broadcast %cst_29 : f32 to vector<2x32xf32>
      %68 = arith.addf %67, %66 : vector<2x32xf32>
      %69 = arith.divf %67, %68 : vector<2x32xf32>
      %70 = vector.extract_strided_slice %50 {offsets = [0, 64], sizes = [2, 32], strides = [1, 1]} : vector<2x96xf32> to vector<2x32xf32>
      %71 = vector.extract_strided_slice %53 {offsets = [0, 64], sizes = [2, 32], strides = [1, 1]} : vector<2x96xf32> to vector<2x32xf32>
      %72 = arith.mulf %61, %71 : vector<2x32xf32>
      %73 = arith.addf %70, %72 : vector<2x32xf32>
      %74 = math.tanh %73 : vector<2x32xf32>
      %cst_30 = arith.constant 1.000000e+00 : f32
      %75 = vector.broadcast %cst_30 : f32 to vector<2x32xf32>
      %76 = arith.subf %75, %69 : vector<2x32xf32>
      %77 = arith.mulf %76, %74 : vector<2x32xf32>
      %78 = arith.mulf %69, %45 : vector<2x32xf32>
      %79 = arith.addf %77, %78 : vector<2x32xf32>
      %c0_31 = arith.constant 0 : index
      %c1_32 = arith.constant 1 : index
      %c0_33 = arith.constant 0 : index
      %c0_34 = arith.constant 0 : index
      %80 = vector.load %arg6[%c0_31, %c1_32, %c0_33, %c0_34] : memref<1x4x2x32xf32, #tpu.memory_space<vmem>>, vector<1x1x2x32xf32>
      %81 = vector.shape_cast %80 : vector<1x1x2x32xf32> to vector<2x32xf32>
      %82 = vector.shape_cast %79 : vector<2x32xf32> to vector<1x1x2x32xf32>
      tpu.vector_store %arg6[%c0_31, %c1_32, %c0_33, %c0_34], %82 {strides = array<i32>} : memref<1x4x2x32xf32, #tpu.memory_space<vmem>>, vector<1x1x2x32xf32>,
      %c0_35 = arith.constant 0 : index
      %c2 = arith.constant 2 : index
      %c0_36 = arith.constant 0 : index
      %c0_37 = arith.constant 0 : index
      %83 = vector.load %arg2[%c0_35, %c2, %c0_36, %c0_37] : memref<1x4x2x96xf32, #tpu.memory_space<vmem>>, vector<1x1x2x96xf32>
      %84 = vector.shape_cast %83 : vector<1x1x2x96xf32> to vector<2x96xf32>
      %cst_38 = arith.constant dense<0.000000e+00> : vector<2x96xf32>
      %85 = tpu.matmul %79, %1, %cst_38 {dimension_numbers = #tpu.dot_dimension_numbers<[1], [0], [0], [1], [0, 0, 1, 1], [], []>} : vector<2x32xf32>, vector<32x96xf32>, vector<2x96xf32> -> vector<2x96xf32>
      %86 = vector.broadcast %3 : vector<1x96xf32> to vector<2x96xf32>
      %87 = arith.addf %85, %86 : vector<2x96xf32>
      %88 = vector.extract_strided_slice %84 {offsets = [0, 0], sizes = [2, 32], strides = [1, 1]} : vector<2x96xf32> to vector<2x32xf32>
      %89 = vector.extract_strided_slice %87 {offsets = [0, 0], sizes = [2, 32], strides = [1, 1]} : vector<2x96xf32> to vector<2x32xf32>
      %90 = arith.addf %88, %89 : vector<2x32xf32>
      %91 = arith.negf %90 : vector<2x32xf32>
      %92 = math.exp %91 : vector<2x32xf32>
      %cst_39 = arith.constant 1.000000e+00 : f32
      %93 = vector.broadcast %cst_39 : f32 to vector<2x32xf32>
      %94 = arith.addf %93, %92 : vector<2x32xf32>
      %95 = arith.divf %93, %94 : vector<2x32xf32>
      %96 = vector.extract_strided_slice %84 {offsets = [0, 32], sizes = [2, 32], strides = [1, 1]} : vector<2x96xf32> to vector<2x32xf32>
      %97 = vector.extract_strided_slice %87 {offsets = [0, 32], sizes = [2, 32], strides = [1, 1]} : vector<2x96xf32> to vector<2x32xf32>
      %98 = arith.addf %96, %97 : vector<2x32xf32>
      %99 = arith.negf %98 : vector<2x32xf32>
      %100 = math.exp %99 : vector<2x32xf32>
      %cst_40 = arith.constant 1.000000e+00 : f32
      %101 = vector.broadcast %cst_40 : f32 to vector<2x32xf32>
      %102 = arith.addf %101, %100 : vector<2x32xf32>
      %103 = arith.divf %101, %102 : vector<2x32xf32>
      %104 = vector.extract_strided_slice %84 {offsets = [0, 64], sizes = [2, 32], strides = [1, 1]} : vector<2x96xf32> to vector<2x32xf32>
      %105 = vector.extract_strided_slice %87 {offsets = [0, 64], sizes = [2, 32], strides = [1, 1]} : vector<2x96xf32> to vector<2x32xf32>
      %106 = arith.mulf %95, %105 : vector<2x32xf32>
      %107 = arith.addf %104, %106 : vector<2x32xf32>
      %108 = math.tanh %107 : vector<2x32xf32>
      %cst_41 = arith.constant 1.000000e+00 : f32
      %109 = vector.broadcast %cst_41 : f32 to vector<2x32xf32>
      %110 = arith.subf %109, %103 : vector<2x32xf32>
      %111 = arith.mulf %110, %108 : vector<2x32xf32>
      %112 = arith.mulf %103, %79 : vector<2x32xf32>
      %113 = arith.addf %111, %112 : vector<2x32xf32>
      %c0_42 = arith.constant 0 : index
      %c2_43 = arith.constant 2 : index
      %c0_44 = arith.constant 0 : index
      %c0_45 = arith.constant 0 : index
      %114 = vector.load %arg6[%c0_42, %c2_43, %c0_44, %c0_45] : memref<1x4x2x32xf32, #tpu.memory_space<vmem>>, vector<1x1x2x32xf32>
      %115 = vector.shape_cast %114 : vector<1x1x2x32xf32> to vector<2x32xf32>
      %116 = vector.shape_cast %113 : vector<2x32xf32> to vector<1x1x2x32xf32>
      tpu.vector_store %arg6[%c0_42, %c2_43, %c0_44, %c0_45], %116 {strides = array<i32>} : memref<1x4x2x32xf32, #tpu.memory_space<vmem>>, vector<1x1x2x32xf32>,
      %c0_46 = arith.constant 0 : index
      %c3 = arith.constant 3 : index
      %c0_47 = arith.constant 0 : index
      %c0_48 = arith.constant 0 : index
      %117 = vector.load %arg2[%c0_46, %c3, %c0_47, %c0_48] : memref<1x4x2x96xf32, #tpu.memory_space<vmem>>, vector<1x1x2x96xf32>
      %118 = vector.shape_cast %117 : vector<1x1x2x96xf32> to vector<2x96xf32>
      %cst_49 = arith.constant dense<0.000000e+00> : vector<2x96xf32>
      %119 = tpu.matmul %113, %1, %cst_49 {dimension_numbers = #tpu.dot_dimension_numbers<[1], [0], [0], [1], [0, 0, 1, 1], [], []>} : vector<2x32xf32>, vector<32x96xf32>, vector<2x96xf32> -> vector<2x96xf32>
      %120 = vector.broadcast %3 : vector<1x96xf32> to vector<2x96xf32>
      %121 = arith.addf %119, %120 : vector<2x96xf32>
      %122 = vector.extract_strided_slice %118 {offsets = [0, 0], sizes = [2, 32], strides = [1, 1]} : vector<2x96xf32> to vector<2x32xf32>
      %123 = vector.extract_strided_slice %121 {offsets = [0, 0], sizes = [2, 32], strides = [1, 1]} : vector<2x96xf32> to vector<2x32xf32>
      %124 = arith.addf %122, %123 : vector<2x32xf32>
      %125 = arith.negf %124 : vector<2x32xf32>
      %126 = math.exp %125 : vector<2x32xf32>
      %cst_50 = arith.constant 1.000000e+00 : f32
      %127 = vector.broadcast %cst_50 : f32 to vector<2x32xf32>
      %128 = arith.addf %127, %126 : vector<2x32xf32>
      %129 = arith.divf %127, %128 : vector<2x32xf32>
      %130 = vector.extract_strided_slice %118 {offsets = [0, 32], sizes = [2, 32], strides = [1, 1]} : vector<2x96xf32> to vector<2x32xf32>
      %131 = vector.extract_strided_slice %121 {offsets = [0, 32], sizes = [2, 32], strides = [1, 1]} : vector<2x96xf32> to vector<2x32xf32>
      %132 = arith.addf %130, %131 : vector<2x32xf32>
      %133 = arith.negf %132 : vector<2x32xf32>
      %134 = math.exp %133 : vector<2x32xf32>
      %cst_51 = arith.constant 1.000000e+00 : f32
      %135 = vector.broadcast %cst_51 : f32 to vector<2x32xf32>
      %136 = arith.addf %135, %134 : vector<2x32xf32>
      %137 = arith.divf %135, %136 : vector<2x32xf32>
      %138 = vector.extract_strided_slice %118 {offsets = [0, 64], sizes = [2, 32], strides = [1, 1]} : vector<2x96xf32> to vector<2x32xf32>
      %139 = vector.extract_strided_slice %121 {offsets = [0, 64], sizes = [2, 32], strides = [1, 1]} : vector<2x96xf32> to vector<2x32xf32>
      %140 = arith.mulf %129, %139 : vector<2x32xf32>
      %141 = arith.addf %138, %140 : vector<2x32xf32>
      %142 = math.tanh %141 : vector<2x32xf32>
      %cst_52 = arith.constant 1.000000e+00 : f32
      %143 = vector.broadcast %cst_52 : f32 to vector<2x32xf32>
      %144 = arith.subf %143, %137 : vector<2x32xf32>
      %145 = arith.mulf %144, %142 : vector<2x32xf32>
      %146 = arith.mulf %137, %113 : vector<2x32xf32>
      %147 = arith.addf %145, %146 : vector<2x32xf32>
      %c0_53 = arith.constant 0 : index
      %c3_54 = arith.constant 3 : index
      %c0_55 = arith.constant 0 : index
      %c0_56 = arith.constant 0 : index
      %148 = vector.load %arg6[%c0_53, %c3_54, %c0_55, %c0_56] : memref<1x4x2x32xf32, #tpu.memory_space<vmem>>, vector<1x1x2x32xf32>
      %149 = vector.shape_cast %148 : vector<1x1x2x32xf32> to vector<2x32xf32>
      %150 = vector.shape_cast %147 : vector<2x32xf32> to vector<1x1x2x32xf32>
      tpu.vector_store %arg6[%c0_53, %c3_54, %c0_55, %c0_56], %150 {strides = array<i32>} : memref<1x4x2x32xf32, #tpu.memory_space<vmem>>, vector<1x1x2x32xf32>,
      %c0_57 = arith.constant 0 : index
      %c0_58 = arith.constant 0 : index
      %c0_59 = arith.constant 0 : index
      %151 = vector.load %arg8[%c0_57, %c0_58, %c0_59] : memref<2x2x32xf32, #tpu.memory_space<vmem>>, vector<1x2x32xf32>
      %152 = vector.shape_cast %151 : vector<1x2x32xf32> to vector<2x32xf32>
      %153 = vector.shape_cast %147 : vector<2x32xf32> to vector<1x2x32xf32>
      tpu.vector_store %arg8[%c0_57, %c0_58, %c0_59], %153 {strides = array<i32>} : memref<2x2x32xf32, #tpu.memory_space<vmem>>, vector<1x2x32xf32>,
      %c1_i32 = arith.constant 1 : i32
      %154 = arith.cmpi eq, %arg1, %c1_i32 : i32
      %155 = arith.extui %154 : i1 to i32
      %c0_i32_60 = arith.constant 0 : i32
      %156 = arith.cmpi ne, %155, %c0_i32_60 : i32
      scf.if %156 {
        %c0_61 = arith.constant 0 : index
        %c0_62 = arith.constant 0 : index
        %c0_63 = arith.constant 0 : index
        %157 = vector.load %arg7[%c0_61, %c0_62, %c0_63] : memref<1x2x32xf32, #tpu.memory_space<vmem>>, vector<1x2x32xf32>
        %158 = vector.shape_cast %157 : vector<1x2x32xf32> to vector<2x32xf32>
        %159 = vector.shape_cast %147 : vector<2x32xf32> to vector<1x2x32xf32>
        tpu.vector_store %arg7[%c0_61, %c0_62, %c0_63], %159 {strides = array<i32>} : memref<1x2x32xf32, #tpu.memory_space<vmem>>, vector<1x2x32xf32>,
      } else {
      }
    } else {
    }
    %c0_i32_6 = arith.constant 0 : i32
    %7 = arith.cmpi ne, %arg0, %c0_i32_6 : i32
    %8 = arith.extui %7 : i1 to i32
    %c0_i32_7 = arith.constant 0 : i32
    %9 = arith.cmpi ne, %8, %c0_i32_7 : i32
    scf.if %9 {
      %c0_i32_8 = arith.constant 0 : i32
      %10 = arith.cmpi eq, %arg1, %c0_i32_8 : i32
      %11 = arith.extui %10 : i1 to i32
      %c0_i32_9 = arith.constant 0 : i32
      %12 = arith.cmpi ne, %11, %c0_i32_9 : i32
      scf.if %12 {
        %c0_61 = arith.constant 0 : index
        %c0_62 = arith.constant 0 : index
        %c0_63 = arith.constant 0 : index
        %157 = vector.load %arg5[%c0_61, %c0_62, %c0_63] : memref<1x2x32xf32, #tpu.memory_space<vmem>>, vector<1x2x32xf32>
        %158 = vector.shape_cast %157 : vector<1x2x32xf32> to vector<2x32xf32>
        %c1_64 = arith.constant 1 : index
        %c0_65 = arith.constant 0 : index
        %c0_66 = arith.constant 0 : index
        %159 = vector.load %arg8[%c1_64, %c0_65, %c0_66] : memref<2x2x32xf32, #tpu.memory_space<vmem>>, vector<1x2x32xf32>
        %160 = vector.shape_cast %159 : vector<1x2x32xf32> to vector<2x32xf32>
        %161 = vector.shape_cast %158 : vector<2x32xf32> to vector<1x2x32xf32>
        tpu.vector_store %arg8[%c1_64, %c0_65, %c0_66], %161 {strides = array<i32>} : memref<2x2x32xf32, #tpu.memory_space<vmem>>, vector<1x2x32xf32>,
      } else {
      }
      %c1 = arith.constant 1 : index
      %c0_10 = arith.constant 0 : index
      %c0_11 = arith.constant 0 : index
      %13 = vector.load %arg8[%c1, %c0_10, %c0_11] : memref<2x2x32xf32, #tpu.memory_space<vmem>>, vector<1x2x32xf32>
      %14 = vector.shape_cast %13 : vector<1x2x32xf32> to vector<2x32xf32>
      %c0_12 = arith.constant 0 : index
      %c3 = arith.constant 3 : index
      %c0_13 = arith.constant 0 : index
      %c0_14 = arith.constant 0 : index
      %15 = vector.load %arg2[%c0_12, %c3, %c0_13, %c0_14] : memref<1x4x2x96xf32, #tpu.memory_space<vmem>>, vector<1x1x2x96xf32>
      %16 = vector.shape_cast %15 : vector<1x1x2x96xf32> to vector<2x96xf32>
      %cst = arith.constant dense<0.000000e+00> : vector<2x96xf32>
      %17 = tpu.matmul %14, %1, %cst {dimension_numbers = #tpu.dot_dimension_numbers<[1], [0], [0], [1], [0, 0, 1, 1], [], []>} : vector<2x32xf32>, vector<32x96xf32>, vector<2x96xf32> -> vector<2x96xf32>
      %18 = vector.broadcast %3 : vector<1x96xf32> to vector<2x96xf32>
      %19 = arith.addf %17, %18 : vector<2x96xf32>
      %20 = vector.extract_strided_slice %16 {offsets = [0, 0], sizes = [2, 32], strides = [1, 1]} : vector<2x96xf32> to vector<2x32xf32>
      %21 = vector.extract_strided_slice %19 {offsets = [0, 0], sizes = [2, 32], strides = [1, 1]} : vector<2x96xf32> to vector<2x32xf32>
      %22 = arith.addf %20, %21 : vector<2x32xf32>
      %23 = arith.negf %22 : vector<2x32xf32>
      %24 = math.exp %23 : vector<2x32xf32>
      %cst_15 = arith.constant 1.000000e+00 : f32
      %25 = vector.broadcast %cst_15 : f32 to vector<2x32xf32>
      %26 = arith.addf %25, %24 : vector<2x32xf32>
      %27 = arith.divf %25, %26 : vector<2x32xf32>
      %28 = vector.extract_strided_slice %16 {offsets = [0, 32], sizes = [2, 32], strides = [1, 1]} : vector<2x96xf32> to vector<2x32xf32>
      %29 = vector.extract_strided_slice %19 {offsets = [0, 32], sizes = [2, 32], strides = [1, 1]} : vector<2x96xf32> to vector<2x32xf32>
      %30 = arith.addf %28, %29 : vector<2x32xf32>
      %31 = arith.negf %30 : vector<2x32xf32>
      %32 = math.exp %31 : vector<2x32xf32>
      %cst_16 = arith.constant 1.000000e+00 : f32
      %33 = vector.broadcast %cst_16 : f32 to vector<2x32xf32>
      %34 = arith.addf %33, %32 : vector<2x32xf32>
      %35 = arith.divf %33, %34 : vector<2x32xf32>
      %36 = vector.extract_strided_slice %16 {offsets = [0, 64], sizes = [2, 32], strides = [1, 1]} : vector<2x96xf32> to vector<2x32xf32>
      %37 = vector.extract_strided_slice %19 {offsets = [0, 64], sizes = [2, 32], strides = [1, 1]} : vector<2x96xf32> to vector<2x32xf32>
      %38 = arith.mulf %27, %37 : vector<2x32xf32>
      %39 = arith.addf %36, %38 : vector<2x32xf32>
      %40 = math.tanh %39 : vector<2x32xf32>
      %cst_17 = arith.constant 1.000000e+00 : f32
      %41 = vector.broadcast %cst_17 : f32 to vector<2x32xf32>
      %42 = arith.subf %41, %35 : vector<2x32xf32>
      %43 = arith.mulf %42, %40 : vector<2x32xf32>
      %44 = arith.mulf %35, %14 : vector<2x32xf32>
      %45 = arith.addf %43, %44 : vector<2x32xf32>
      %c0_18 = arith.constant 0 : index
      %c3_19 = arith.constant 3 : index
      %c0_20 = arith.constant 0 : index
      %c0_21 = arith.constant 0 : index
      %46 = vector.load %arg6[%c0_18, %c3_19, %c0_20, %c0_21] : memref<1x4x2x32xf32, #tpu.memory_space<vmem>>, vector<1x1x2x32xf32>
      %47 = vector.shape_cast %46 : vector<1x1x2x32xf32> to vector<2x32xf32>
      %48 = vector.shape_cast %45 : vector<2x32xf32> to vector<1x1x2x32xf32>
      tpu.vector_store %arg6[%c0_18, %c3_19, %c0_20, %c0_21], %48 {strides = array<i32>} : memref<1x4x2x32xf32, #tpu.memory_space<vmem>>, vector<1x1x2x32xf32>,
      %c0_22 = arith.constant 0 : index
      %c2 = arith.constant 2 : index
      %c0_23 = arith.constant 0 : index
      %c0_24 = arith.constant 0 : index
      %49 = vector.load %arg2[%c0_22, %c2, %c0_23, %c0_24] : memref<1x4x2x96xf32, #tpu.memory_space<vmem>>, vector<1x1x2x96xf32>
      %50 = vector.shape_cast %49 : vector<1x1x2x96xf32> to vector<2x96xf32>
      %cst_25 = arith.constant dense<0.000000e+00> : vector<2x96xf32>
      %51 = tpu.matmul %45, %1, %cst_25 {dimension_numbers = #tpu.dot_dimension_numbers<[1], [0], [0], [1], [0, 0, 1, 1], [], []>} : vector<2x32xf32>, vector<32x96xf32>, vector<2x96xf32> -> vector<2x96xf32>
      %52 = vector.broadcast %3 : vector<1x96xf32> to vector<2x96xf32>
      %53 = arith.addf %51, %52 : vector<2x96xf32>
      %54 = vector.extract_strided_slice %50 {offsets = [0, 0], sizes = [2, 32], strides = [1, 1]} : vector<2x96xf32> to vector<2x32xf32>
      %55 = vector.extract_strided_slice %53 {offsets = [0, 0], sizes = [2, 32], strides = [1, 1]} : vector<2x96xf32> to vector<2x32xf32>
      %56 = arith.addf %54, %55 : vector<2x32xf32>
      %57 = arith.negf %56 : vector<2x32xf32>
      %58 = math.exp %57 : vector<2x32xf32>
      %cst_26 = arith.constant 1.000000e+00 : f32
      %59 = vector.broadcast %cst_26 : f32 to vector<2x32xf32>
      %60 = arith.addf %59, %58 : vector<2x32xf32>
      %61 = arith.divf %59, %60 : vector<2x32xf32>
      %62 = vector.extract_strided_slice %50 {offsets = [0, 32], sizes = [2, 32], strides = [1, 1]} : vector<2x96xf32> to vector<2x32xf32>
      %63 = vector.extract_strided_slice %53 {offsets = [0, 32], sizes = [2, 32], strides = [1, 1]} : vector<2x96xf32> to vector<2x32xf32>
      %64 = arith.addf %62, %63 : vector<2x32xf32>
      %65 = arith.negf %64 : vector<2x32xf32>
      %66 = math.exp %65 : vector<2x32xf32>
      %cst_27 = arith.constant 1.000000e+00 : f32
      %67 = vector.broadcast %cst_27 : f32 to vector<2x32xf32>
      %68 = arith.addf %67, %66 : vector<2x32xf32>
      %69 = arith.divf %67, %68 : vector<2x32xf32>
      %70 = vector.extract_strided_slice %50 {offsets = [0, 64], sizes = [2, 32], strides = [1, 1]} : vector<2x96xf32> to vector<2x32xf32>
      %71 = vector.extract_strided_slice %53 {offsets = [0, 64], sizes = [2, 32], strides = [1, 1]} : vector<2x96xf32> to vector<2x32xf32>
      %72 = arith.mulf %61, %71 : vector<2x32xf32>
      %73 = arith.addf %70, %72 : vector<2x32xf32>
      %74 = math.tanh %73 : vector<2x32xf32>
      %cst_28 = arith.constant 1.000000e+00 : f32
      %75 = vector.broadcast %cst_28 : f32 to vector<2x32xf32>
      %76 = arith.subf %75, %69 : vector<2x32xf32>
      %77 = arith.mulf %76, %74 : vector<2x32xf32>
      %78 = arith.mulf %69, %45 : vector<2x32xf32>
      %79 = arith.addf %77, %78 : vector<2x32xf32>
      %c0_29 = arith.constant 0 : index
      %c2_30 = arith.constant 2 : index
      %c0_31 = arith.constant 0 : index
      %c0_32 = arith.constant 0 : index
      %80 = vector.load %arg6[%c0_29, %c2_30, %c0_31, %c0_32] : memref<1x4x2x32xf32, #tpu.memory_space<vmem>>, vector<1x1x2x32xf32>
      %81 = vector.shape_cast %80 : vector<1x1x2x32xf32> to vector<2x32xf32>
      %82 = vector.shape_cast %79 : vector<2x32xf32> to vector<1x1x2x32xf32>
      tpu.vector_store %arg6[%c0_29, %c2_30, %c0_31, %c0_32], %82 {strides = array<i32>} : memref<1x4x2x32xf32, #tpu.memory_space<vmem>>, vector<1x1x2x32xf32>,
      %c0_33 = arith.constant 0 : index
      %c1_34 = arith.constant 1 : index
      %c0_35 = arith.constant 0 : index
      %c0_36 = arith.constant 0 : index
      %83 = vector.load %arg2[%c0_33, %c1_34, %c0_35, %c0_36] : memref<1x4x2x96xf32, #tpu.memory_space<vmem>>, vector<1x1x2x96xf32>
      %84 = vector.shape_cast %83 : vector<1x1x2x96xf32> to vector<2x96xf32>
      %cst_37 = arith.constant dense<0.000000e+00> : vector<2x96xf32>
      %85 = tpu.matmul %79, %1, %cst_37 {dimension_numbers = #tpu.dot_dimension_numbers<[1], [0], [0], [1], [0, 0, 1, 1], [], []>} : vector<2x32xf32>, vector<32x96xf32>, vector<2x96xf32> -> vector<2x96xf32>
      %86 = vector.broadcast %3 : vector<1x96xf32> to vector<2x96xf32>
      %87 = arith.addf %85, %86 : vector<2x96xf32>
      %88 = vector.extract_strided_slice %84 {offsets = [0, 0], sizes = [2, 32], strides = [1, 1]} : vector<2x96xf32> to vector<2x32xf32>
      %89 = vector.extract_strided_slice %87 {offsets = [0, 0], sizes = [2, 32], strides = [1, 1]} : vector<2x96xf32> to vector<2x32xf32>
      %90 = arith.addf %88, %89 : vector<2x32xf32>
      %91 = arith.negf %90 : vector<2x32xf32>
      %92 = math.exp %91 : vector<2x32xf32>
      %cst_38 = arith.constant 1.000000e+00 : f32
      %93 = vector.broadcast %cst_38 : f32 to vector<2x32xf32>
      %94 = arith.addf %93, %92 : vector<2x32xf32>
      %95 = arith.divf %93, %94 : vector<2x32xf32>
      %96 = vector.extract_strided_slice %84 {offsets = [0, 32], sizes = [2, 32], strides = [1, 1]} : vector<2x96xf32> to vector<2x32xf32>
      %97 = vector.extract_strided_slice %87 {offsets = [0, 32], sizes = [2, 32], strides = [1, 1]} : vector<2x96xf32> to vector<2x32xf32>
      %98 = arith.addf %96, %97 : vector<2x32xf32>
      %99 = arith.negf %98 : vector<2x32xf32>
      %100 = math.exp %99 : vector<2x32xf32>
      %cst_39 = arith.constant 1.000000e+00 : f32
      %101 = vector.broadcast %cst_39 : f32 to vector<2x32xf32>
      %102 = arith.addf %101, %100 : vector<2x32xf32>
      %103 = arith.divf %101, %102 : vector<2x32xf32>
      %104 = vector.extract_strided_slice %84 {offsets = [0, 64], sizes = [2, 32], strides = [1, 1]} : vector<2x96xf32> to vector<2x32xf32>
      %105 = vector.extract_strided_slice %87 {offsets = [0, 64], sizes = [2, 32], strides = [1, 1]} : vector<2x96xf32> to vector<2x32xf32>
      %106 = arith.mulf %95, %105 : vector<2x32xf32>
      %107 = arith.addf %104, %106 : vector<2x32xf32>
      %108 = math.tanh %107 : vector<2x32xf32>
      %cst_40 = arith.constant 1.000000e+00 : f32
      %109 = vector.broadcast %cst_40 : f32 to vector<2x32xf32>
      %110 = arith.subf %109, %103 : vector<2x32xf32>
      %111 = arith.mulf %110, %108 : vector<2x32xf32>
      %112 = arith.mulf %103, %79 : vector<2x32xf32>
      %113 = arith.addf %111, %112 : vector<2x32xf32>
      %c0_41 = arith.constant 0 : index
      %c1_42 = arith.constant 1 : index
      %c0_43 = arith.constant 0 : index
      %c0_44 = arith.constant 0 : index
      %114 = vector.load %arg6[%c0_41, %c1_42, %c0_43, %c0_44] : memref<1x4x2x32xf32, #tpu.memory_space<vmem>>, vector<1x1x2x32xf32>
      %115 = vector.shape_cast %114 : vector<1x1x2x32xf32> to vector<2x32xf32>
      %116 = vector.shape_cast %113 : vector<2x32xf32> to vector<1x1x2x32xf32>
      tpu.vector_store %arg6[%c0_41, %c1_42, %c0_43, %c0_44], %116 {strides = array<i32>} : memref<1x4x2x32xf32, #tpu.memory_space<vmem>>, vector<1x1x2x32xf32>,
      %c0_45 = arith.constant 0 : index
      %c0_46 = arith.constant 0 : index
      %c0_47 = arith.constant 0 : index
      %c0_48 = arith.constant 0 : index
      %117 = vector.load %arg2[%c0_45, %c0_46, %c0_47, %c0_48] : memref<1x4x2x96xf32, #tpu.memory_space<vmem>>, vector<1x1x2x96xf32>
      %118 = vector.shape_cast %117 : vector<1x1x2x96xf32> to vector<2x96xf32>
      %cst_49 = arith.constant dense<0.000000e+00> : vector<2x96xf32>
      %119 = tpu.matmul %113, %1, %cst_49 {dimension_numbers = #tpu.dot_dimension_numbers<[1], [0], [0], [1], [0, 0, 1, 1], [], []>} : vector<2x32xf32>, vector<32x96xf32>, vector<2x96xf32> -> vector<2x96xf32>
      %120 = vector.broadcast %3 : vector<1x96xf32> to vector<2x96xf32>
      %121 = arith.addf %119, %120 : vector<2x96xf32>
      %122 = vector.extract_strided_slice %118 {offsets = [0, 0], sizes = [2, 32], strides = [1, 1]} : vector<2x96xf32> to vector<2x32xf32>
      %123 = vector.extract_strided_slice %121 {offsets = [0, 0], sizes = [2, 32], strides = [1, 1]} : vector<2x96xf32> to vector<2x32xf32>
      %124 = arith.addf %122, %123 : vector<2x32xf32>
      %125 = arith.negf %124 : vector<2x32xf32>
      %126 = math.exp %125 : vector<2x32xf32>
      %cst_50 = arith.constant 1.000000e+00 : f32
      %127 = vector.broadcast %cst_50 : f32 to vector<2x32xf32>
      %128 = arith.addf %127, %126 : vector<2x32xf32>
      %129 = arith.divf %127, %128 : vector<2x32xf32>
      %130 = vector.extract_strided_slice %118 {offsets = [0, 32], sizes = [2, 32], strides = [1, 1]} : vector<2x96xf32> to vector<2x32xf32>
      %131 = vector.extract_strided_slice %121 {offsets = [0, 32], sizes = [2, 32], strides = [1, 1]} : vector<2x96xf32> to vector<2x32xf32>
      %132 = arith.addf %130, %131 : vector<2x32xf32>
      %133 = arith.negf %132 : vector<2x32xf32>
      %134 = math.exp %133 : vector<2x32xf32>
      %cst_51 = arith.constant 1.000000e+00 : f32
      %135 = vector.broadcast %cst_51 : f32 to vector<2x32xf32>
      %136 = arith.addf %135, %134 : vector<2x32xf32>
      %137 = arith.divf %135, %136 : vector<2x32xf32>
      %138 = vector.extract_strided_slice %118 {offsets = [0, 64], sizes = [2, 32], strides = [1, 1]} : vector<2x96xf32> to vector<2x32xf32>
      %139 = vector.extract_strided_slice %121 {offsets = [0, 64], sizes = [2, 32], strides = [1, 1]} : vector<2x96xf32> to vector<2x32xf32>
      %140 = arith.mulf %129, %139 : vector<2x32xf32>
      %141 = arith.addf %138, %140 : vector<2x32xf32>
      %142 = math.tanh %141 : vector<2x32xf32>
      %cst_52 = arith.constant 1.000000e+00 : f32
      %143 = vector.broadcast %cst_52 : f32 to vector<2x32xf32>
      %144 = arith.subf %143, %137 : vector<2x32xf32>
      %145 = arith.mulf %144, %142 : vector<2x32xf32>
      %146 = arith.mulf %137, %113 : vector<2x32xf32>
      %147 = arith.addf %145, %146 : vector<2x32xf32>
      %c0_53 = arith.constant 0 : index
      %c0_54 = arith.constant 0 : index
      %c0_55 = arith.constant 0 : index
      %c0_56 = arith.constant 0 : index
      %148 = vector.load %arg6[%c0_53, %c0_54, %c0_55, %c0_56] : memref<1x4x2x32xf32, #tpu.memory_space<vmem>>, vector<1x1x2x32xf32>
      %149 = vector.shape_cast %148 : vector<1x1x2x32xf32> to vector<2x32xf32>
      %150 = vector.shape_cast %147 : vector<2x32xf32> to vector<1x1x2x32xf32>
      tpu.vector_store %arg6[%c0_53, %c0_54, %c0_55, %c0_56], %150 {strides = array<i32>} : memref<1x4x2x32xf32, #tpu.memory_space<vmem>>, vector<1x1x2x32xf32>,
      %c1_57 = arith.constant 1 : index
      %c0_58 = arith.constant 0 : index
      %c0_59 = arith.constant 0 : index
      %151 = vector.load %arg8[%c1_57, %c0_58, %c0_59] : memref<2x2x32xf32, #tpu.memory_space<vmem>>, vector<1x2x32xf32>
      %152 = vector.shape_cast %151 : vector<1x2x32xf32> to vector<2x32xf32>
      %153 = vector.shape_cast %147 : vector<2x32xf32> to vector<1x2x32xf32>
      tpu.vector_store %arg8[%c1_57, %c0_58, %c0_59], %153 {strides = array<i32>} : memref<2x2x32xf32, #tpu.memory_space<vmem>>, vector<1x2x32xf32>,
      %c1_i32 = arith.constant 1 : i32
      %154 = arith.cmpi eq, %arg1, %c1_i32 : i32
      %155 = arith.extui %154 : i1 to i32
      %c0_i32_60 = arith.constant 0 : i32
      %156 = arith.cmpi ne, %155, %c0_i32_60 : i32
      scf.if %156 {
        %c0_61 = arith.constant 0 : index
        %c0_62 = arith.constant 0 : index
        %c0_63 = arith.constant 0 : index
        %157 = vector.load %arg7[%c0_61, %c0_62, %c0_63] : memref<1x2x32xf32, #tpu.memory_space<vmem>>, vector<1x2x32xf32>
        %158 = vector.shape_cast %157 : vector<1x2x32xf32> to vector<2x32xf32>
        %159 = vector.shape_cast %147 : vector<2x32xf32> to vector<1x2x32xf32>
        tpu.vector_store %arg7[%c0_61, %c0_62, %c0_63], %159 {strides = array<i32>} : memref<1x2x32xf32, #tpu.memory_space<vmem>>, vector<1x2x32xf32>,
      } else {
      }
    } else {
    }
    return
  }
  func.func @transform_0(%arg0: i32, %arg1: i32) -> (i32, i32, i32, i32) {
    %c1_i32 = arith.constant 1 : i32
    %0 = arith.subi %c1_i32, %arg0 : i32
    %1 = arith.muli %arg1, %0 : i32
    %c1_i32_0 = arith.constant 1 : i32
    %2 = arith.subi %c1_i32_0, %arg1 : i32
    %3 = arith.muli %2, %arg0 : i32
    %4 = arith.addi %1, %3 : i32
    %c0_i32 = arith.constant 0 : i32
    %c0_i32_1 = arith.constant 0 : i32
    %c0_i32_2 = arith.constant 0 : i32
    return %arg0, %4, %c0_i32, %c0_i32_1 : i32, i32, i32, i32
  }
  func.func @transform_1(%arg0: i32, %arg1: i32) -> (i32, i32, i32) {
    %c0_i32 = arith.constant 0 : i32
    %c0_i32_0 = arith.constant 0 : i32
    %c0_i32_1 = arith.constant 0 : i32
    return %arg0, %c0_i32, %c0_i32_0 : i32, i32, i32
  }
  func.func @transform_2(%arg0: i32, %arg1: i32) -> (i32, i32, i32) {
    %c0_i32 = arith.constant 0 : i32
    %c0_i32_0 = arith.constant 0 : i32
    %c0_i32_1 = arith.constant 0 : i32
    return %arg0, %c0_i32, %c0_i32_0 : i32, i32, i32
  }
  func.func @transform_3(%arg0: i32, %arg1: i32) -> (i32, i32, i32) {
    %c0_i32 = arith.constant 0 : i32
    %c0_i32_0 = arith.constant 0 : i32
    %c0_i32_1 = arith.constant 0 : i32
    return %arg0, %c0_i32, %c0_i32_0 : i32, i32, i32
  }
  func.func @transform_4(%arg0: i32, %arg1: i32) -> (i32, i32, i32, i32) {
    %c1_i32 = arith.constant 1 : i32
    %0 = arith.subi %c1_i32, %arg0 : i32
    %1 = arith.muli %arg1, %0 : i32
    %c1_i32_0 = arith.constant 1 : i32
    %2 = arith.subi %c1_i32_0, %arg1 : i32
    %3 = arith.muli %2, %arg0 : i32
    %4 = arith.addi %1, %3 : i32
    %c0_i32 = arith.constant 0 : i32
    %c0_i32_1 = arith.constant 0 : i32
    %c0_i32_2 = arith.constant 0 : i32
    return %arg0, %4, %c0_i32, %c0_i32_1 : i32, i32, i32, i32
  }
  func.func @transform_5(%arg0: i32, %arg1: i32) -> (i32, i32, i32) {
    %c0_i32 = arith.constant 0 : i32
    %c0_i32_0 = arith.constant 0 : i32
    %c0_i32_1 = arith.constant 0 : i32
    return %arg0, %c0_i32, %c0_i32_0 : i32, i32, i32
  }
}

</mosaic_0001>

<llo_original>
// kernel: tpu_custom_call.1
$region0: #{tpu_custom_call.1}
  #allocation0 [shape = 'u32[]', space=smem, size = 0x4, offset = 0x4, fixed_abs, tag = 'smem constant byte address 0x4 - core index']
  #allocation1 [shape = 'u32[144,128]{1,0:T(1,128)}', space=vmem, size = 0x12000, scoped, tag = 'internal scratch']
  #allocation2 [shape = 'f32[2,2,32]{2,1,0:T(2,128)}', space=vmem, size = 0x800, scoped, tag = 'scratch operand']
  %s0 = inlined_call_operand.hbm [shape: f32[2,8,2,96], index: 0, kind: input, shape index: {}]
  %s1 = inlined_call_operand.hbm [shape: f32[2,32,96], index: 1, kind: input, shape index: {}]
  %s2 = inlined_call_operand.hbm [shape: f32[2,1,96], index: 2, kind: input, shape index: {}]
  %s3 = inlined_call_operand.vmem [shape: f32[2,2,32], index: 3, kind: input, shape index: {}]
  %s4 = inlined_call_operand.hbm [shape: f32[2,8,2,32], index: 4, kind: output, shape index: {0}]
  %s5 = inlined_call_operand.hbm [shape: f32[2,2,32], index: 5, kind: output, shape index: {1}]
  %6 = xla_tuple %s4, %s5
  %s7 = sld [smem:[#allocation0]]
  $region93: #{tpu_custom_call.1} parent=0
    _
  %s9 = ssub.s32 1, %s7
  %s10 = scalar_select 0, %s9, %s7
  $region1: #{tpu_custom_call.1} parent=0
    #allocation3 [shape = 'u8[8192]{0}', space=vmem, size = 0x2000, scoped, tag = 'input window, operand 0']
    #allocation4 [shape = 's32[2]{0}', space=sflag, size = 0x8, scoped, tag = 'scoped memory for tpu_custom_call.1']
    #allocation5 [shape = 's32[2]{0}', space=sflag, size = 0x8, scoped, tag = 'scoped memory for tpu_custom_call.1']
    #allocation6 [shape = 'u8[32768]{0}', space=vmem, size = 0x8000, scoped, tag = 'input window, operand 1']
    #allocation7 [shape = 's32[2]{0}', space=sflag, size = 0x8, scoped, tag = 'scoped memory for tpu_custom_call.1']
    #allocation8 [shape = 'u8[1024]{0}', space=vmem, size = 0x400, scoped, tag = 'input window, operand 2']
    #allocation9 [shape = 'u8[8192]{0}', space=vmem, size = 0x2000, scoped, tag = 'output window, operand 0']
    #allocation10 [shape = 'u8[2048]{0}', space=vmem, size = 0x800, scoped, tag = 'output window, operand 1']
    #allocation11 [shape = 's32[2]{0}', space=sflag, size = 0x8, scoped, tag = 'scoped memory for tpu_custom_call.1']
    %11 = vsyncpa [#allocation4], 0
    %s12 = scalar_lea.sflag [#allocation4], 1
    %13 = vsyncpa %s12, 0
    %14 = vsyncpa [#allocation7], 0
    %s15 = scalar_lea.sflag [#allocation7], 1
    %16 = vsyncpa %s15, 0
    %17 = vsyncpa [#allocation5], 0
    %s18 = scalar_lea.sflag [#allocation5], 1
    %19 = vsyncpa %s18, 0
    %20 = vsyncpa [#allocation11], 0
    %s21 = scalar_lea.sflag [#allocation11], 1
    %22 = vsyncpa %s21, 0
    loop: start=0, step=1, limit=6
    $region2: #{tpu_custom_call.1} parent=1 // loop_pre_header
      _
    $region3: #{tpu_custom_call.1} parent=1 // loop_header
      %s24 = sphi 0, %s28
      %p25 = scmp.ge.s32.totalorder %s24, 6
      %s31 = sphi 0, %s43
      %s32 = sphi 0, %s39
      %s33 = sphi 0, %s31
      %s34 = sphi 0, %s32
      %s35 = sphi 0, %s33
      %s36 = sphi 0, %s34
      %s58 = sphi 0, %s60
      %s61 = sphi 0, %s58
      %s62 = sphi 0, %s61
      %s78 = sphi 0, %s62
      %s84 = sphi 0, %s86
      %s87 = sphi 0, %s84
      %s88 = sphi 0, %s87
      %s104 = sphi 0, %s88
      %s110 = sphi 0, %s112
      %s113 = sphi 0, %s110
      %s114 = sphi 0, %s113
      %s130 = sphi 0, %s114
      %s136 = sphi 0, %s138
      %s139 = sphi 0, %s136
      %s140 = sphi 0, %s139
      %s156 = sphi 0, %s140
      %s174 = sphi 0, %s176
      %s177 = sphi 0, %s174
      %s178 = sphi 0, %s177
      %s194 = sphi 0, %s178
      %s200 = sphi 0, %s202
      %s203 = sphi 0, %s200
      %s204 = sphi 0, %s203
      %s220 = sphi 0, %s204
    $region4: #{tpu_custom_call.1} parent=1 // loop_header_branch
      %27 = sbr.rel (%p25) target = $region8
    $region5: #{tpu_custom_call.1} parent=1 // loop_body
      %s29 = ssub.s32 %s24, 1
      %s30 = ssub.s32 %s24, 2
      %s37 = sadd.s32 1, %s32
      %p38 = scmp.ge.s32.totalorder %s37, 2
      %s39 = scalar_select %p38, 0, %s37
      %s40 = sadd.s32 1, %s31
      %s41 = scalar_select %p38, %s40, %s31
      %p42 = scmp.ge.s32.totalorder %s41, 2
      %s43 = scalar_select %p42, 0, %s41
      %s44 = ssub.s32 1, %s31
      %s45 = smul.u32 %s32, %s44
      %s46 = ssub.s32 1, %s32
      %s47 = smul.u32 %s46, %s31
      %s48 = sadd.s32 %s45, %s47
      %s49 = ssub.s32 1, %s43
      %s50 = smul.u32 %s39, %s49
      %s51 = ssub.s32 1, %s39
      %s52 = smul.u32 %s51, %s43
      %s53 = sadd.s32 %s50, %s52
      %s54 = ssub.s32 %s31, %s43
      %s55 = ssub.s32 %s48, %s53
      %s56 = sor.u32 %s54, %s55
      %p57 = scmp.eq.s32.totalorder %s56, 0
      %s59 = sadd.s32 %s58, 1
      %s60 = scalar_select %p57, %s58, %s59
      %p63 = pneg %p57
      %p64 = scmp.eq.s32.totalorder %s24, 3
      %p65 = por %p63, %p64
      %p66 = scmp.ne.s32.totalorder %s58, %s61
      %p67 = scmp.eq.s32.totalorder %s24, 0
      %p68 = por %p66, %p67
      %p69 = scmp.ne.s32.totalorder %s58, %s61
      %p70 = scmp.eq.s32.totalorder %s29, 3
      %p71 = por %p69, %p70
      %p72 = scmp.ne.s32.totalorder %s61, %s62
      %p73 = scmp.eq.s32.totalorder %s29, 0
      %p74 = por %p72, %p73
      %p75 = scmp.ne.s32.totalorder %s61, %s62
      %p76 = scmp.eq.s32.totalorder %s30, 3
      %p77 = por %p75, %p76
      %p79 = scmp.ne.s32.totalorder %s62, %s78
      %p80 = scmp.eq.s32.totalorder %s30, 0
      %p81 = por %p79, %p80
      %s82 = ssub.s32 %s31, %s43
      %p83 = scmp.eq.s32.totalorder %s82, 0
      %s85 = sadd.s32 %s84, 1
      %s86 = scalar_select %p83, %s84, %s85
      %p89 = pneg %p83
      %p90 = scmp.eq.s32.totalorder %s24, 3
      %p91 = por %p89, %p90
      %p92 = scmp.ne.s32.totalorder %s84, %s87
      %p93 = scmp.eq.s32.totalorder %s24, 0
      %p94 = por %p92, %p93
      %p95 = scmp.ne.s32.totalorder %s84, %s87
      %p96 = scmp.eq.s32.totalorder %s29, 3
      %p97 = por %p95, %p96
      %p98 = scmp.ne.s32.totalorder %s87, %s88
      %p99 = scmp.eq.s32.totalorder %s29, 0
      %p100 = por %p98, %p99
      %p101 = scmp.ne.s32.totalorder %s87, %s88
      %p102 = scmp.eq.s32.totalorder %s30, 3
      %p103 = por %p101, %p102
      %p105 = scmp.ne.s32.totalorder %s88, %s104
      %p106 = scmp.eq.s32.totalorder %s30, 0
      %p107 = por %p105, %p106
      %s108 = ssub.s32 %s31, %s43
      %p109 = scmp.eq.s32.totalorder %s108, 0
      %s111 = sadd.s32 %s110, 1
      %s112 = scalar_select %p109, %s110, %s111
      %p115 = pneg %p109
      %p116 = scmp.eq.s32.totalorder %s24, 3
      %p117 = por %p115, %p116
      %p118 = scmp.ne.s32.totalorder %s110, %s113
      %p119 = scmp.eq.s32.totalorder %s24, 0
      %p120 = por %p118, %p119
      %p121 = scmp.ne.s32.totalorder %s110, %s113
      %p122 = scmp.eq.s32.totalorder %s29, 3
      %p123 = por %p121, %p122
      %p124 = scmp.ne.s32.totalorder %s113, %s114
      %p125 = scmp.eq.s32.totalorder %s29, 0
      %p126 = por %p124, %p125
      %p127 = scmp.ne.s32.totalorder %s113, %s114
      %p128 = scmp.eq.s32.totalorder %s30, 3
      %p129 = por %p127, %p128
      %p131 = scmp.ne.s32.totalorder %s114, %s130
      %p132 = scmp.eq.s32.totalorder %s30, 0
      %p133 = por %p131, %p132
      %s134 = ssub.s32 %s31, %s43
      %p135 = scmp.eq.s32.totalorder %s134, 0
      %s137 = sadd.s32 %s136, 1
      %s138 = scalar_select %p135, %s136, %s137
      %p141 = pneg %p135
      %p142 = scmp.eq.s32.totalorder %s24, 3
      %p143 = por %p141, %p142
      %p144 = scmp.ne.s32.totalorder %s136, %s139
      %p145 = scmp.eq.s32.totalorder %s24, 0
      %p146 = por %p144, %p145
      %p147 = scmp.ne.s32.totalorder %s136, %s139
      %p148 = scmp.eq.s32.totalorder %s29, 3
      %p149 = por %p147, %p148
      %p150 = scmp.ne.s32.totalorder %s139, %s140
      %p151 = scmp.eq.s32.totalorder %s29, 0
      %p152 = por %p150, %p151
      %p153 = scmp.ne.s32.totalorder %s139, %s140
      %p154 = scmp.eq.s32.totalorder %s30, 3
      %p155 = por %p153, %p154
      %p157 = scmp.ne.s32.totalorder %s140, %s156
      %p158 = scmp.eq.s32.totalorder %s30, 0
      %p159 = por %p157, %p158
      %s160 = ssub.s32 1, %s31
      %s161 = smul.u32 %s32, %s160
      %s162 = ssub.s32 1, %s32
      %s163 = smul.u32 %s162, %s31
      %s164 = sadd.s32 %s161, %s163
      %s165 = ssub.s32 1, %s43
      %s166 = smul.u32 %s39, %s165
      %s167 = ssub.s32 1, %s39
      %s168 = smul.u32 %s167, %s43
      %s169 = sadd.s32 %s166, %s168
      %s170 = ssub.s32 %s31, %s43
      %s171 = ssub.s32 %s164, %s169
      %s172 = sor.u32 %s170, %s171
      %p173 = scmp.eq.s32.totalorder %s172, 0
      %s175 = sadd.s32 %s174, 1
      %s176 = scalar_select %p173, %s174, %s175
      %p179 = pneg %p173
      %p180 = scmp.eq.s32.totalorder %s24, 3
      %p181 = por %p179, %p180
      %p182 = scmp.ne.s32.totalorder %s174, %s177
      %p183 = scmp.eq.s32.totalorder %s24, 0
      %p184 = por %p182, %p183
      %p185 = scmp.ne.s32.totalorder %s174, %s177
      %p186 = scmp.eq.s32.totalorder %s29, 3
      %p187 = por %p185, %p186
      %p188 = scmp.ne.s32.totalorder %s177, %s178
      %p189 = scmp.eq.s32.totalorder %s29, 0
      %p190 = por %p188, %p189
      %p191 = scmp.ne.s32.totalorder %s177, %s178
      %p192 = scmp.eq.s32.totalorder %s30, 3
      %p193 = por %p191, %p192
      %p195 = scmp.ne.s32.totalorder %s178, %s194
      %p196 = scmp.eq.s32.totalorder %s30, 0
      %p197 = por %p195, %p196
      %s198 = ssub.s32 %s31, %s43
      %p199 = scmp.eq.s32.totalorder %s198, 0
      %s201 = sadd.s32 %s200, 1
      %s202 = scalar_select %p199, %s200, %s201
      %p205 = pneg %p199
      %p206 = scmp.eq.s32.totalorder %s24, 3
      %p207 = por %p205, %p206
      %p208 = scmp.ne.s32.totalorder %s200, %s203
      %p209 = scmp.eq.s32.totalorder %s24, 0
      %p210 = por %p208, %p209
      %p211 = scmp.ne.s32.totalorder %s200, %s203
      %p212 = scmp.eq.s32.totalorder %s29, 3
      %p213 = por %p211, %p212
      %p214 = scmp.ne.s32.totalorder %s203, %s204
      %p215 = scmp.eq.s32.totalorder %s29, 0
      %p216 = por %p214, %p215
      %p217 = scmp.ne.s32.totalorder %s203, %s204
      %p218 = scmp.eq.s32.totalorder %s30, 3
      %p219 = por %p217, %p218
      %p221 = scmp.ne.s32.totalorder %s204, %s220
      %p222 = scmp.eq.s32.totalorder %s30, 0
      %p223 = por %p221, %p222
      %p224 = scmp.le.s32.totalorder 1, %s24
      %p225 = scmp.lt.s32.totalorder %s24, 5
      %p226 = pnand %p224, %p225
      %p227 = pneg %p226
      // Predicated region
      $region9: #{tpu_custom_call.1} parent=5 // pred_check
        _
      $region10: #{tpu_custom_call.1} parent=5 // pred_check_branch
        %229 = sbr.rel (%p226) target = $region12
      $region11: #{tpu_custom_call.1} parent=5 // pred_region
        %s230 = ssub.s32 %s24, 1
      $region12: #{tpu_custom_call.1} parent=5 // pred_fallthru
        _
      %p231 = scmp.lt.s32.totalorder %s24, 4
      // Predicated region
      $region13: #{tpu_custom_call.1} parent=5 // pred_check
        %p232 = pneg %p231
      $region14: #{tpu_custom_call.1} parent=5 // pred_check_branch
        %234 = sbr.rel (%p232) target = $region16
      $region15: #{tpu_custom_call.1} parent=5 // pred_region
        // Predicated region
        $region17: #{tpu_custom_call.1} parent=15 // pred_check
          %p235 = pneg %p68
        $region18: #{tpu_custom_call.1} parent=15 // pred_check_branch
          %237 = sbr.rel (%p235) target = $region20
        $region19: #{tpu_custom_call.1} parent=15 // pred_region
          %s238 = sand.u32 %s58, 1
          %s239 = scalar_lea.sflag [#allocation4], %s238
          %s240 = sand.u32 %s58, 1
          %s241 = smul.addr %s240, 8
          %s242 = scalar_lea.vmem [#allocation3], %s241
          %s243 = ssub.s32 1, %s31
          %s244 = smul.u32 %s32, %s243
          %s245 = ssub.s32 1, %s32
          %s246 = smul.u32 %s245, %s31
          %s247 = sadd.s32 %s244, %s246
          %s248 = smul.u32 4, %s247
          %s250 = ssub.s32 128, 128
          %251 = vsyncadd %s239, %s250
          %s252 = smul.addr %s31, 8
          %s253 = sadd.s32 %s248, %s252
          %s254 = smul.addr %s253, 32
          %s255 = scalar_lea.hbm %s0, %s254
          %s256 = sshll.u32 %s242, 4
          %s257 = int_to_ptr.vmem [resolvable:$true] %s256
          %262 = dma.hbm_to_vmem [thread:$0]  %s255, 128, %s257, %s239, 32, 32, 2
        $region20: #{tpu_custom_call.1} parent=15 // pred_fallthru
          _
        // Predicated region
        $region21: #{tpu_custom_call.1} parent=15 // pred_check
          %p263 = pneg %p94
        $region22: #{tpu_custom_call.1} parent=15 // pred_check_branch
          %265 = sbr.rel (%p263) target = $region24
        $region23: #{tpu_custom_call.1} parent=15 // pred_region
          %s266 = sand.u32 %s24, 1
          %s267 = scalar_lea.sflag [#allocation7], %s266
          %s268 = sand.u32 %s84, 1
          %s269 = smul.addr %s268, 32
          %s270 = scalar_lea.vmem [#allocation6], %s269
          %s272 = ssub.s32 512, 512
          %273 = vsyncadd %s267, %s272
          %s274 = smul.addr %s31, 4
          %s275 = smul.addr %s274, 128
          %s276 = scalar_lea.hbm %s1, %s275
          %s277 = sshll.u32 %s270, 4
          %s278 = int_to_ptr.vmem [resolvable:$true] %s277
          %283 = dma.hbm_to_vmem [thread:$0]  %s276, 512, %s278, %s267, 128, 128, 8
        $region24: #{tpu_custom_call.1} parent=15 // pred_fallthru
          _
        // Predicated region
        $region25: #{tpu_custom_call.1} parent=15 // pred_check
          %p284 = pneg %p120
        $region26: #{tpu_custom_call.1} parent=15 // pred_check_branch
          %286 = sbr.rel (%p284) target = $region28
        $region27: #{tpu_custom_call.1} parent=15 // pred_region
          %s287 = sand.u32 %s24, 1
          %s288 = scalar_lea.sflag [#allocation7], %s287
          %s289 = sand.u32 %s110, 1
          %s290 = scalar_lea.vmem [#allocation8], %s289
          %s292 = ssub.s32 16, 16
          %293 = vsyncadd %s288, %s292
          %s294 = smul.addr %s31, 16
          %s295 = scalar_lea.hbm %s2, %s294
          %s297 = sshll.u32 %s290, 4
          %s298 = int_to_ptr.vmem [resolvable:$true] %s297
          %300 = dma.hbm_to_vmem [thread:$0]  %s295, 16, %s298, %s288
        $region28: #{tpu_custom_call.1} parent=15 // pred_fallthru
          _
        // Predicated region
        $region29: #{tpu_custom_call.1} parent=15 // pred_check
          %p301 = pneg %p146
        $region30: #{tpu_custom_call.1} parent=15 // pred_check_branch
          %303 = sbr.rel (%p301) target = $region32
        $region31: #{tpu_custom_call.1} parent=15 // pred_region
          %p304 = scmp.lt.s32.totalorder %s31, 1
          %s305 = scalar_select %p304, %s31, 1
          %s306 = smul.addr %s305, 2
          %s307 = scalar_lea.vmem %s3, %s306
        $region32: #{tpu_custom_call.1} parent=15 // pred_fallthru
          _
      $region16: #{tpu_custom_call.1} parent=5 // pred_fallthru
        _
      %p308 = scmp.le.s32.totalorder 1, %s24
      %p309 = scmp.lt.s32.totalorder %s24, 5
      %p310 = pnand %p308, %p309
      %p311 = pneg %p310
      // Predicated region
      $region33: #{tpu_custom_call.1} parent=5 // pred_check
        _
      $region34: #{tpu_custom_call.1} parent=5 // pred_check_branch
        %313 = sbr.rel (%p310) target = $region36
      $region35: #{tpu_custom_call.1} parent=5 // pred_region
        %s314 = ssub.s32 %s24, 1
        %s315 = sand.u32 %s61, 1
        %s316 = scalar_lea.sflag [#allocation4], %s315
        %s317 = sand.u32 %s61, 1
        %s318 = smul.addr %s317, 8
        %s319 = scalar_lea.vmem [#allocation3], %s318
        // Predicated region
        $region37: #{tpu_custom_call.1} parent=35 // pred_check
          %p320 = pneg %p74
        $region38: #{tpu_custom_call.1} parent=35 // pred_check_branch
          %322 = sbr.rel (%p320) target = $region40
        $region39: #{tpu_custom_call.1} parent=35 // pred_region
          %323 = dma.done %s316, 128
        $region40: #{tpu_custom_call.1} parent=35 // pred_fallthru
          _
        %s324 = sand.u32 %s29, 1
        %s325 = scalar_lea.sflag [#allocation7], %s324
        %s326 = sand.u32 %s87, 1
        %s327 = smul.addr %s326, 32
        %s328 = scalar_lea.vmem [#allocation6], %s327
        // Predicated region
        $region41: #{tpu_custom_call.1} parent=35 // pred_check
          %p329 = pneg %p100
        $region42: #{tpu_custom_call.1} parent=35 // pred_check_branch
          %331 = sbr.rel (%p329) target = $region44
        $region43: #{tpu_custom_call.1} parent=35 // pred_region
          %332 = dma.done %s325, 512
        $region44: #{tpu_custom_call.1} parent=35 // pred_fallthru
          _
        %s333 = sand.u32 %s29, 1
        %s334 = scalar_lea.sflag [#allocation7], %s333
        %s335 = sand.u32 %s113, 1
        %s336 = scalar_lea.vmem [#allocation8], %s335
        // Predicated region
        $region45: #{tpu_custom_call.1} parent=35 // pred_check
          %p337 = pneg %p126
        $region46: #{tpu_custom_call.1} parent=35 // pred_check_branch
          %339 = sbr.rel (%p337) target = $region48
        $region47: #{tpu_custom_call.1} parent=35 // pred_region
          %340 = dma.done %s334, 16
        $region48: #{tpu_custom_call.1} parent=35 // pred_fallthru
          _
        %s341 = sand.u32 %s61, 1
        %s342 = scalar_lea.sflag [#allocation4], %s341
        %s343 = sand.u32 %s61, 1
        %s344 = smul.addr %s343, 8
        %s345 = scalar_lea.vmem [#allocation3], %s344
        %p346 = pneg %p74
        %p347 = pneg %p71
        %s348 = sand.u32 %s29, 1
        %s349 = scalar_lea.sflag [#allocation7], %s348
        %s350 = sand.u32 %s87, 1
        %s351 = smul.addr %s350, 32
        %s352 = scalar_lea.vmem [#allocation6], %s351
        %p353 = pneg %p100
        %p354 = pneg %p97
        %s355 = sand.u32 %s29, 1
        %s356 = scalar_lea.sflag [#allocation7], %s355
        %s357 = sand.u32 %s113, 1
        %s358 = scalar_lea.vmem [#allocation8], %s357
        %p359 = pneg %p126
        %p360 = pneg %p123
        %p361 = scmp.lt.s32.totalorder %s33, 1
        %s362 = scalar_select %p361, %s33, 1
        %s363 = smul.addr %s362, 2
        %s364 = scalar_lea.vmem %s3, %s363
        %p365 = pneg %p152
        %p366 = pneg %p149
        %p367 = pneg %p190
        %p368 = pneg %p187
        %s369 = sand.u32 %s177, 1
        %s370 = scalar_lea.sflag [#allocation5], %s369
        %s371 = sand.u32 %s177, 1
        %s372 = smul.addr %s371, 8
        %s373 = scalar_lea.vmem [#allocation9], %s372
        %p374 = pneg %p216
        %p375 = pneg %p213
        %s376 = sand.u32 %s203, 1
        %s377 = scalar_lea.sflag [#allocation11], %s376
        %s378 = sand.u32 %s203, 1
        %s379 = smul.addr %s378, 2
        %s380 = scalar_lea.vmem [#allocation10], %s379
        %s381 = ssub.s32 1, %s33
        %s382 = smul.u32 %s34, %s381
        %s383 = ssub.s32 1, %s34
        %s384 = smul.u32 %s383, %s33
        %s385 = sadd.s32 %s382, %s384
        %s386 = smul.u32 4, %s385
        %p387 = scmp.lt.s32.totalorder %s33, 1
        %s388 = scalar_select %p387, %s33, 1
        %s389 = smul.addr %s388, 2
        %s390 = scalar_lea.vmem %s3, %s389
        %s391 = ssub.s32 1, %s33
        %s392 = smul.u32 %s34, %s391
        %s393 = ssub.s32 1, %s34
        %s394 = smul.u32 %s393, %s33
        %s395 = sadd.s32 %s392, %s394
        %s396 = smul.u32 4, %s395
        %v397 = vld [vmem:[%s328] sm:$0xff]
        %v398 = vld [vmem:[%s328 + $0x8] sm:$0xff]
        %v399 = vld [vmem:[%s328 + $0x10] sm:$0xff]
        %v400 = vld [vmem:[%s328 + $0x18] sm:$0xff]
        %v401 = vld [vmem:[%s336] sm:$0x1]
        %p402 = scmp.eq.s32.totalorder %s33, 0
        // Predicated region
        $region49: #{tpu_custom_call.1} parent=35 // pred_check
          %p403 = pneg %p402
        $region50: #{tpu_custom_call.1} parent=35 // pred_check_branch
          %405 = sbr.rel (%p403) target = $region52
        $region51: #{tpu_custom_call.1} parent=35 // pred_region
          %p406 = scmp.eq.s32.totalorder %s34, 0
          // Predicated region
          $region53: #{tpu_custom_call.1} parent=51 // pred_check
            %p407 = pneg %p406
          $region54: #{tpu_custom_call.1} parent=51 // pred_check_branch
            %409 = sbr.rel (%p407) target = $region56
          $region55: #{tpu_custom_call.1} parent=51 // pred_region
            %v410 = vld [vmem:[%s390] sm:$0x3]
            %vm411 = vcmask 254976
            %412 = vst.msk [vmem:[#allocation2] sm:$0x3] %vm411, %v410
          $region56: #{tpu_custom_call.1} parent=51 // pred_fallthru
            _
          %v413 = vld [vmem:[#allocation2] sm:$0x3]
          %v414 = vld [vmem:[%s319] sm:$0x3]
          %v416 = vlaneseq
          %v417 = vshrl.u32 %v416, 7
          %v418 = vsub.s32 0, %v417
          %v419 = vrot.slane %v401, %v418
          %vm421 = vcmask 261120
          %v423 = vsel %vm421, %v413, 0
          %425 = vmatprep.subr.mxu0 0.0
          %426 = vmatpush1.msra.mxu0 0.0
          %427 = vmatprep.subr.mxu0 0.0
          %428 = vmatpush1.msra.mxu0 0.0
          %429 = vmatprep.subr.mxu0 0.0
          %430 = vmatpush1.msra.mxu0 0.0
          %431 = vmatprep.subr.mxu0 0.0
          %432 = vmatpush1.msra.mxu0 0.0
          %433 = vmatprep.subr.mxu0 0.0
          %434 = vmatpush1.msra.mxu0 0.0
          %435 = vmatprep.subr.mxu0 0.0
          %436 = vmatpush1.msra.mxu0 0.0
          %437 = vmatprep.subr.mxu0 0.0
          %438 = vmatpush1.msra.mxu0 0.0
          %439 = vmatprep.subr.mxu0 0.0
          %440 = vmatpush1.msra.mxu0 0.0
          %441 = vmatprep.subr.mxu0 0.0
          %442 = vmatpush1.msra.mxu0 0.0
          %443 = vmatprep.subr.mxu0 0.0
          %444 = vmatpush1.msra.mxu0 0.0
          %445 = vmatprep.subr.mxu0 0.0
          %446 = vmatpush1.msra.mxu0 0.0
          %447 = vmatprep.subr.mxu0 0.0
          %448 = vmatpush1.msra.mxu0 0.0
          %449 = vmatprep.subr.mxu0 0.0
          %450 = vmatpush1.msra.mxu0 %v400
          %451 = vmatprep.subr.mxu0 0.0
          %452 = vmatpush1.msra.mxu0 %v399
          %453 = vmatprep.subr.mxu0 0.0
          %454 = vmatpush1.msra.mxu0 %v398
          %455 = vmatprep.subr.mxu0 0.0
          %456 = vmatpush1.msra.mxu0 %v397
          %457 = vmatprep.subr.mxu0 0.0
          %458 = vmatpush2.msra.mxu0 0.0
          %459 = vmatprep.subr.mxu0 0.0
          %460 = vmatpush2.msra.mxu0 0.0
          %461 = vmatprep.subr.mxu0 0.0
          %462 = vmatpush2.msra.mxu0 0.0
          %463 = vmatprep.subr.mxu0 0.0
          %464 = vmatpush2.msra.mxu0 0.0
          %465 = vmatprep.subr.mxu0 0.0
          %466 = vmatpush2.msra.mxu0 0.0
          %467 = vmatprep.subr.mxu0 0.0
          %468 = vmatpush2.msra.mxu0 0.0
          %469 = vmatprep.subr.mxu0 0.0
          %470 = vmatpush2.msra.mxu0 0.0
          %471 = vmatprep.subr.mxu0 0.0
          %472 = vmatpush2.msra.mxu0 0.0
          %473 = vmatprep.subr.mxu0 0.0
          %474 = vmatpush2.msra.mxu0 0.0
          %475 = vmatprep.subr.mxu0 0.0
          %476 = vmatpush2.msra.mxu0 0.0
          %477 = vmatprep.subr.mxu0 0.0
          %478 = vmatpush2.msra.mxu0 0.0
          %479 = vmatprep.subr.mxu0 0.0
          %480 = vmatpush2.msra.mxu0 0.0
          %481 = vmatprep.subr.mxu0 0.0
          %482 = vmatpush2.msra.mxu0 0.0
          %483 = vmatprep.subr.mxu0 0.0
          %484 = vmatpush2.msra.mxu0 0.0
          %485 = vmatprep.subr.mxu0 0.0
          %486 = vmatpush2.msra.mxu0 0.0
          %487 = vmatprep.subr.mxu0 0.0
          %488 = vmatpush2.msra.mxu0 0.0
          %489 = vmatprep.mubr.f32.mxu0 0.0
          %490 = vmatmul.mubr.f32.gmra.mxu0 %v423
          %v491 = vpop.f32.mrf.mxu0
          %v492 = vadd.f32 %v419, %v491
          %v493 = vpop.f32.mrf.mxu0
          %494 = vdwg.mxu0
          %v495 = vadd.f32 %v414, %v492
          %v496 = vxor.u32 %v495, 2147483648
          %v497 = vmul.f32 %v496, 1.442695
          %v498 = vpow.pop %v497
          %v499 = vadd.f32 %v498, 1.0
          %v500 = vrcp.pop %v499
          %v501 = vmul.f32 1.0, %v500
          %503 = vrot.lane.b32.xlu0 %v492, 64
          %v504 = vpop.permute.xlu0 %503
          %v506 = vmul.f32 %v501, %v504
          %508 = vrot.lane.b32.xlu0 %v506, 64
          %v509 = vpop.permute.xlu0 %508
          %v511 = vadd.f32 %v414, %v509
          %v512 = vtanh.pop %v511
          %v513 = vsub.f32 1.0, %v501
          %515 = vrot.lane.b32.xlu0 %v512, 96
          %v516 = vpop.permute.xlu0 %515
          %v518 = vmul.f32 %v513, %v516
          %519 = vrot.lane.b32.xlu0 %v413, 32
          %v520 = vpop.permute.xlu0 %519
          %v522 = vmul.f32 %v501, %v520
          %v523 = vadd.f32 %v518, %v522
          %525 = vrot.lane.b32.xlu0 %v523, 96
          %v526 = vpop.permute.xlu0 %525
          %vm528 = vcmask 254976
          %529 = vst.msk [vmem:[%s373] sm:$0x3] %vm528, %v526
          %s530 = scalar_lea.vmem %s319, 2 [#allocation3]
          %v531 = vld [vmem:[%s530] sm:$0x3]
          %v532 = vsel %vm421, %v526, 0
          %534 = vmatprep.subr.mxu0 0.0
          %535 = vmatpush1.msra.mxu0 0.0
          %536 = vmatprep.subr.mxu0 0.0
          %537 = vmatpush1.msra.mxu0 0.0
          %538 = vmatprep.subr.mxu0 0.0
          %539 = vmatpush1.msra.mxu0 0.0
          %540 = vmatprep.subr.mxu0 0.0
          %541 = vmatpush1.msra.mxu0 0.0
          %542 = vmatprep.subr.mxu0 0.0
          %543 = vmatpush1.msra.mxu0 0.0
          %544 = vmatprep.subr.mxu0 0.0
          %545 = vmatpush1.msra.mxu0 0.0
          %546 = vmatprep.subr.mxu0 0.0
          %547 = vmatpush1.msra.mxu0 0.0
          %548 = vmatprep.subr.mxu0 0.0
          %549 = vmatpush1.msra.mxu0 0.0
          %550 = vmatprep.subr.mxu0 0.0
          %551 = vmatpush1.msra.mxu0 0.0
          %552 = vmatprep.subr.mxu0 0.0
          %553 = vmatpush1.msra.mxu0 0.0
          %554 = vmatprep.subr.mxu0 0.0
          %555 = vmatpush1.msra.mxu0 0.0
          %556 = vmatprep.subr.mxu0 0.0
          %557 = vmatpush1.msra.mxu0 0.0
          %558 = vmatprep.subr.mxu0 0.0
          %559 = vmatpush1.msra.mxu0 %v400
          %560 = vmatprep.subr.mxu0 0.0
          %561 = vmatpush1.msra.mxu0 %v399
          %562 = vmatprep.subr.mxu0 0.0
          %563 = vmatpush1.msra.mxu0 %v398
          %564 = vmatprep.subr.mxu0 0.0
          %565 = vmatpush1.msra.mxu0 %v397
          %566 = vmatprep.subr.mxu0 0.0
          %567 = vmatpush2.msra.mxu0 0.0
          %568 = vmatprep.subr.mxu0 0.0
          %569 = vmatpush2.msra.mxu0 0.0
          %570 = vmatprep.subr.mxu0 0.0
          %571 = vmatpush2.msra.mxu0 0.0
          %572 = vmatprep.subr.mxu0 0.0
          %573 = vmatpush2.msra.mxu0 0.0
          %574 = vmatprep.subr.mxu0 0.0
          %575 = vmatpush2.msra.mxu0 0.0
          %576 = vmatprep.subr.mxu0 0.0
          %577 = vmatpush2.msra.mxu0 0.0
          %578 = vmatprep.subr.mxu0 0.0
          %579 = vmatpush2.msra.mxu0 0.0
          %580 = vmatprep.subr.mxu0 0.0
          %581 = vmatpush2.msra.mxu0 0.0
          %582 = vmatprep.subr.mxu0 0.0
          %583 = vmatpush2.msra.mxu0 0.0
          %584 = vmatprep.subr.mxu0 0.0
          %585 = vmatpush2.msra.mxu0 0.0
          %586 = vmatprep.subr.mxu0 0.0
          %587 = vmatpush2.msra.mxu0 0.0
          %588 = vmatprep.subr.mxu0 0.0
          %589 = vmatpush2.msra.mxu0 0.0
          %590 = vmatprep.subr.mxu0 0.0
          %591 = vmatpush2.msra.mxu0 0.0
          %592 = vmatprep.subr.mxu0 0.0
          %593 = vmatpush2.msra.mxu0 0.0
          %594 = vmatprep.subr.mxu0 0.0
          %595 = vmatpush2.msra.mxu0 0.0
          %596 = vmatprep.subr.mxu0 0.0
          %597 = vmatpush2.msra.mxu0 0.0
          %598 = vmatprep.mubr.f32.mxu0 0.0
          %599 = vmatmul.mubr.f32.gmra.mxu0 %v532
          %v600 = vpop.f32.mrf.mxu0
          %v601 = vadd.f32 %v419, %v600
          %v602 = vpop.f32.mrf.mxu0
          %603 = vdwg.mxu0
          %v604 = vadd.f32 %v531, %v601
          %v605 = vxor.u32 %v604, 2147483648
          %v606 = vmul.f32 %v605, 1.442695
          %v607 = vpow.pop %v606
          %v608 = vadd.f32 %v607, 1.0
          %v609 = vrcp.pop %v608
          %v610 = vmul.f32 1.0, %v609
          %612 = vrot.lane.b32.xlu0 %v601, 64
          %v613 = vpop.permute.xlu0 %612
          %v615 = vmul.f32 %v610, %v613
          %617 = vrot.lane.b32.xlu0 %v615, 64
          %v618 = vpop.permute.xlu0 %617
          %v620 = vadd.f32 %v531, %v618
          %v621 = vtanh.pop %v620
          %v622 = vsub.f32 1.0, %v610
          %624 = vrot.lane.b32.xlu0 %v621, 96
          %v625 = vpop.permute.xlu0 %624
          %v627 = vmul.f32 %v622, %v625
          %v628 = vmul.f32 %v610, %v523
          %v629 = vadd.f32 %v627, %v628
          %631 = vrot.lane.b32.xlu0 %v629, 96
          %v632 = vpop.permute.xlu0 %631
          %s634 = scalar_lea.vmem %s373, 2 [#allocation9]
          %635 = vst.msk [vmem:[%s634] sm:$0x3] %vm528, %v632
          %s636 = scalar_lea.vmem %s319, 4 [#allocation3]
          %v637 = vld [vmem:[%s636] sm:$0x3]
          %v638 = vsel %vm421, %v632, 0
          %640 = vmatprep.subr.mxu0 0.0
          %641 = vmatpush1.msra.mxu0 0.0
          %642 = vmatprep.subr.mxu0 0.0
          %643 = vmatpush1.msra.mxu0 0.0
          %644 = vmatprep.subr.mxu0 0.0
          %645 = vmatpush1.msra.mxu0 0.0
          %646 = vmatprep.subr.mxu0 0.0
          %647 = vmatpush1.msra.mxu0 0.0
          %648 = vmatprep.subr.mxu0 0.0
          %649 = vmatpush1.msra.mxu0 0.0
          %650 = vmatprep.subr.mxu0 0.0
          %651 = vmatpush1.msra.mxu0 0.0
          %652 = vmatprep.subr.mxu0 0.0
          %653 = vmatpush1.msra.mxu0 0.0
          %654 = vmatprep.subr.mxu0 0.0
          %655 = vmatpush1.msra.mxu0 0.0
          %656 = vmatprep.subr.mxu0 0.0
          %657 = vmatpush1.msra.mxu0 0.0
          %658 = vmatprep.subr.mxu0 0.0
          %659 = vmatpush1.msra.mxu0 0.0
          %660 = vmatprep.subr.mxu0 0.0
          %661 = vmatpush1.msra.mxu0 0.0
          %662 = vmatprep.subr.mxu0 0.0
          %663 = vmatpush1.msra.mxu0 0.0
          %664 = vmatprep.subr.mxu0 0.0
          %665 = vmatpush1.msra.mxu0 %v400
          %666 = vmatprep.subr.mxu0 0.0
          %667 = vmatpush1.msra.mxu0 %v399
          %668 = vmatprep.subr.mxu0 0.0
          %669 = vmatpush1.msra.mxu0 %v398
          %670 = vmatprep.subr.mxu0 0.0
          %671 = vmatpush1.msra.mxu0 %v397
          %672 = vmatprep.subr.mxu0 0.0
          %673 = vmatpush2.msra.mxu0 0.0
          %674 = vmatprep.subr.mxu0 0.0
          %675 = vmatpush2.msra.mxu0 0.0
          %676 = vmatprep.subr.mxu0 0.0
          %677 = vmatpush2.msra.mxu0 0.0
          %678 = vmatprep.subr.mxu0 0.0
          %679 = vmatpush2.msra.mxu0 0.0
          %680 = vmatprep.subr.mxu0 0.0
          %681 = vmatpush2.msra.mxu0 0.0
          %682 = vmatprep.subr.mxu0 0.0
          %683 = vmatpush2.msra.mxu0 0.0
          %684 = vmatprep.subr.mxu0 0.0
          %685 = vmatpush2.msra.mxu0 0.0
          %686 = vmatprep.subr.mxu0 0.0
          %687 = vmatpush2.msra.mxu0 0.0
          %688 = vmatprep.subr.mxu0 0.0
          %689 = vmatpush2.msra.mxu0 0.0
          %690 = vmatprep.subr.mxu0 0.0
          %691 = vmatpush2.msra.mxu0 0.0
          %692 = vmatprep.subr.mxu0 0.0
          %693 = vmatpush2.msra.mxu0 0.0
          %694 = vmatprep.subr.mxu0 0.0
          %695 = vmatpush2.msra.mxu0 0.0
          %696 = vmatprep.subr.mxu0 0.0
          %697 = vmatpush2.msra.mxu0 0.0
          %698 = vmatprep.subr.mxu0 0.0
          %699 = vmatpush2.msra.mxu0 0.0
          %700 = vmatprep.subr.mxu0 0.0
          %701 = vmatpush2.msra.mxu0 0.0
          %702 = vmatprep.subr.mxu0 0.0
          %703 = vmatpush2.msra.mxu0 0.0
          %704 = vmatprep.mubr.f32.mxu0 0.0
          %705 = vmatmul.mubr.f32.gmra.mxu0 %v638
          %v706 = vpop.f32.mrf.mxu0
          %v707 = vadd.f32 %v419, %v706
          %v708 = vpop.f32.mrf.mxu0
          %709 = vdwg.mxu0
          %v710 = vadd.f32 %v637, %v707
          %v711 = vxor.u32 %v710, 2147483648
          %v712 = vmul.f32 %v711, 1.442695
          %v713 = vpow.pop %v712
          %v714 = vadd.f32 %v713, 1.0
          %v715 = vrcp.pop %v714
          %v716 = vmul.f32 1.0, %v715
          %718 = vrot.lane.b32.xlu0 %v707, 64
          %v719 = vpop.permute.xlu0 %718
          %v721 = vmul.f32 %v716, %v719
          %723 = vrot.lane.b32.xlu0 %v721, 64
          %v724 = vpop.permute.xlu0 %723
          %v726 = vadd.f32 %v637, %v724
          %v727 = vtanh.pop %v726
          %v728 = vsub.f32 1.0, %v716
          %730 = vrot.lane.b32.xlu0 %v727, 96
          %v731 = vpop.permute.xlu0 %730
          %v733 = vmul.f32 %v728, %v731
          %v734 = vmul.f32 %v716, %v629
          %v735 = vadd.f32 %v733, %v734
          %737 = vrot.lane.b32.xlu0 %v735, 96
          %v738 = vpop.permute.xlu0 %737
          %s740 = scalar_lea.vmem %s373, 4 [#allocation9]
          %741 = vst.msk [vmem:[%s740] sm:$0x3] %vm528, %v738
          %s742 = scalar_lea.vmem %s319, 6 [#allocation3]
          %v743 = vld [vmem:[%s742] sm:$0x3]
          %v744 = vsel %vm421, %v738, 0
          %746 = vmatprep.subr.mxu0 0.0
          %747 = vmatpush1.msra.mxu0 0.0
          %748 = vmatprep.subr.mxu0 0.0
          %749 = vmatpush1.msra.mxu0 0.0
          %750 = vmatprep.subr.mxu0 0.0
          %751 = vmatpush1.msra.mxu0 0.0
          %752 = vmatprep.subr.mxu0 0.0
          %753 = vmatpush1.msra.mxu0 0.0
          %754 = vmatprep.subr.mxu0 0.0
          %755 = vmatpush1.msra.mxu0 0.0
          %756 = vmatprep.subr.mxu0 0.0
          %757 = vmatpush1.msra.mxu0 0.0
          %758 = vmatprep.subr.mxu0 0.0
          %759 = vmatpush1.msra.mxu0 0.0
          %760 = vmatprep.subr.mxu0 0.0
          %761 = vmatpush1.msra.mxu0 0.0
          %762 = vmatprep.subr.mxu0 0.0
          %763 = vmatpush1.msra.mxu0 0.0
          %764 = vmatprep.subr.mxu0 0.0
          %765 = vmatpush1.msra.mxu0 0.0
          %766 = vmatprep.subr.mxu0 0.0
          %767 = vmatpush1.msra.mxu0 0.0
          %768 = vmatprep.subr.mxu0 0.0
          %769 = vmatpush1.msra.mxu0 0.0
          %770 = vmatprep.subr.mxu0 0.0
          %771 = vmatpush1.msra.mxu0 %v400
          %772 = vmatprep.subr.mxu0 0.0
          %773 = vmatpush1.msra.mxu0 %v399
          %774 = vmatprep.subr.mxu0 0.0
          %775 = vmatpush1.msra.mxu0 %v398
          %776 = vmatprep.subr.mxu0 0.0
          %777 = vmatpush1.msra.mxu0 %v397
          %778 = vmatprep.subr.mxu0 0.0
          %779 = vmatpush2.msra.mxu0 0.0
          %780 = vmatprep.subr.mxu0 0.0
          %781 = vmatpush2.msra.mxu0 0.0
          %782 = vmatprep.subr.mxu0 0.0
          %783 = vmatpush2.msra.mxu0 0.0
          %784 = vmatprep.subr.mxu0 0.0
          %785 = vmatpush2.msra.mxu0 0.0
          %786 = vmatprep.subr.mxu0 0.0
          %787 = vmatpush2.msra.mxu0 0.0
          %788 = vmatprep.subr.mxu0 0.0
          %789 = vmatpush2.msra.mxu0 0.0
          %790 = vmatprep.subr.mxu0 0.0
          %791 = vmatpush2.msra.mxu0 0.0
          %792 = vmatprep.subr.mxu0 0.0
          %793 = vmatpush2.msra.mxu0 0.0
          %794 = vmatprep.subr.mxu0 0.0
          %795 = vmatpush2.msra.mxu0 0.0
          %796 = vmatprep.subr.mxu0 0.0
          %797 = vmatpush2.msra.mxu0 0.0
          %798 = vmatprep.subr.mxu0 0.0
          %799 = vmatpush2.msra.mxu0 0.0
          %800 = vmatprep.subr.mxu0 0.0
          %801 = vmatpush2.msra.mxu0 0.0
          %802 = vmatprep.subr.mxu0 0.0
          %803 = vmatpush2.msra.mxu0 0.0
          %804 = vmatprep.subr.mxu0 0.0
          %805 = vmatpush2.msra.mxu0 0.0
          %806 = vmatprep.subr.mxu0 0.0
          %807 = vmatpush2.msra.mxu0 0.0
          %808 = vmatprep.subr.mxu0 0.0
          %809 = vmatpush2.msra.mxu0 0.0
          %810 = vmatprep.mubr.f32.mxu0 0.0
          %811 = vmatmul.mubr.f32.gmra.mxu0 %v744
          %v812 = vpop.f32.mrf.mxu0
          %v813 = vadd.f32 %v419, %v812
          %v814 = vpop.f32.mrf.mxu0
          %815 = vdwg.mxu0
          %v816 = vadd.f32 %v743, %v813
          %v817 = vxor.u32 %v816, 2147483648
          %v818 = vmul.f32 %v817, 1.442695
          %v819 = vpow.pop %v818
          %v820 = vadd.f32 %v819, 1.0
          %v821 = vrcp.pop %v820
          %v822 = vmul.f32 1.0, %v821
          %824 = vrot.lane.b32.xlu0 %v813, 64
          %v825 = vpop.permute.xlu0 %824
          %v827 = vmul.f32 %v822, %v825
          %829 = vrot.lane.b32.xlu0 %v827, 64
          %v830 = vpop.permute.xlu0 %829
          %v832 = vadd.f32 %v743, %v830
          %v833 = vtanh.pop %v832
          %v834 = vsub.f32 1.0, %v822
          %836 = vrot.lane.b32.xlu0 %v833, 96
          %v837 = vpop.permute.xlu0 %836
          %v839 = vmul.f32 %v834, %v837
          %v840 = vmul.f32 %v822, %v735
          %v841 = vadd.f32 %v839, %v840
          %843 = vrot.lane.b32.xlu0 %v841, 96
          %v844 = vpop.permute.xlu0 %843
          %s846 = scalar_lea.vmem %s373, 6 [#allocation9]
          %847 = vst.msk [vmem:[%s846] sm:$0x3] %vm528, %v844
          %848 = vst.msk [vmem:[#allocation2] sm:$0x3] %vm528, %v844
          %p849 = scmp.eq.s32.totalorder %s34, 1
          // Predicated region
          $region57: #{tpu_custom_call.1} parent=51 // pred_check
            %p850 = pneg %p849
          $region58: #{tpu_custom_call.1} parent=51 // pred_check_branch
            %852 = sbr.rel (%p850) target = $region60
          $region59: #{tpu_custom_call.1} parent=51 // pred_region
            %853 = vst.msk [vmem:[%s380] sm:$0x3] %vm528, %v844
          $region60: #{tpu_custom_call.1} parent=51 // pred_fallthru
            _
        $region52: #{tpu_custom_call.1} parent=35 // pred_fallthru
          _
        %p854 = scmp.ne.s32.totalorder %s33, 0
        // Predicated region
        $region61: #{tpu_custom_call.1} parent=35 // pred_check
          %p855 = pneg %p854
        $region62: #{tpu_custom_call.1} parent=35 // pred_check_branch
          %857 = sbr.rel (%p855) target = $region64
        $region63: #{tpu_custom_call.1} parent=35 // pred_region
          %p858 = scmp.eq.s32.totalorder %s34, 0
          // Predicated region
          $region65: #{tpu_custom_call.1} parent=63 // pred_check
            %p859 = pneg %p858
          $region66: #{tpu_custom_call.1} parent=63 // pred_check_branch
            %861 = sbr.rel (%p859) target = $region68
          $region67: #{tpu_custom_call.1} parent=63 // pred_region
            %v862 = vld [vmem:[%s390] sm:$0x3]
            %s863 = scalar_lea.vmem [#allocation2], 2
            %vm864 = vcmask 254976
            %865 = vst.msk [vmem:[%s863] sm:$0x3] %vm864, %v862
          $region68: #{tpu_custom_call.1} parent=63 // pred_fallthru
            _
          %s866 = scalar_lea.vmem [#allocation2], 2
          %v867 = vld [vmem:[%s866] sm:$0x3]
          %s868 = scalar_lea.vmem %s319, 6 [#allocation3]
          %v869 = vld [vmem:[%s868] sm:$0x3]
          %v871 = vlaneseq
          %v872 = vshrl.u32 %v871, 7
          %v873 = vsub.s32 0, %v872
          %v874 = vrot.slane %v401, %v873
          %vm876 = vcmask 261120
          %v878 = vsel %vm876, %v867, 0
          %880 = vmatprep.subr.mxu0 0.0
          %881 = vmatpush1.msra.mxu0 0.0
          %882 = vmatprep.subr.mxu0 0.0
          %883 = vmatpush1.msra.mxu0 0.0
          %884 = vmatprep.subr.mxu0 0.0
          %885 = vmatpush1.msra.mxu0 0.0
          %886 = vmatprep.subr.mxu0 0.0
          %887 = vmatpush1.msra.mxu0 0.0
          %888 = vmatprep.subr.mxu0 0.0
          %889 = vmatpush1.msra.mxu0 0.0
          %890 = vmatprep.subr.mxu0 0.0
          %891 = vmatpush1.msra.mxu0 0.0
          %892 = vmatprep.subr.mxu0 0.0
          %893 = vmatpush1.msra.mxu0 0.0
          %894 = vmatprep.subr.mxu0 0.0
          %895 = vmatpush1.msra.mxu0 0.0
          %896 = vmatprep.subr.mxu0 0.0
          %897 = vmatpush1.msra.mxu0 0.0
          %898 = vmatprep.subr.mxu0 0.0
          %899 = vmatpush1.msra.mxu0 0.0
          %900 = vmatprep.subr.mxu0 0.0
          %901 = vmatpush1.msra.mxu0 0.0
          %902 = vmatprep.subr.mxu0 0.0
          %903 = vmatpush1.msra.mxu0 0.0
          %904 = vmatprep.subr.mxu0 0.0
          %905 = vmatpush1.msra.mxu0 %v400
          %906 = vmatprep.subr.mxu0 0.0
          %907 = vmatpush1.msra.mxu0 %v399
          %908 = vmatprep.subr.mxu0 0.0
          %909 = vmatpush1.msra.mxu0 %v398
          %910 = vmatprep.subr.mxu0 0.0
          %911 = vmatpush1.msra.mxu0 %v397
          %912 = vmatprep.subr.mxu0 0.0
          %913 = vmatpush2.msra.mxu0 0.0
          %914 = vmatprep.subr.mxu0 0.0
          %915 = vmatpush2.msra.mxu0 0.0
          %916 = vmatprep.subr.mxu0 0.0
          %917 = vmatpush2.msra.mxu0 0.0
          %918 = vmatprep.subr.mxu0 0.0
          %919 = vmatpush2.msra.mxu0 0.0
          %920 = vmatprep.subr.mxu0 0.0
          %921 = vmatpush2.msra.mxu0 0.0
          %922 = vmatprep.subr.mxu0 0.0
          %923 = vmatpush2.msra.mxu0 0.0
          %924 = vmatprep.subr.mxu0 0.0
          %925 = vmatpush2.msra.mxu0 0.0
          %926 = vmatprep.subr.mxu0 0.0
          %927 = vmatpush2.msra.mxu0 0.0
          %928 = vmatprep.subr.mxu0 0.0
          %929 = vmatpush2.msra.mxu0 0.0
          %930 = vmatprep.subr.mxu0 0.0
          %931 = vmatpush2.msra.mxu0 0.0
          %932 = vmatprep.subr.mxu0 0.0
          %933 = vmatpush2.msra.mxu0 0.0
          %934 = vmatprep.subr.mxu0 0.0
          %935 = vmatpush2.msra.mxu0 0.0
          %936 = vmatprep.subr.mxu0 0.0
          %937 = vmatpush2.msra.mxu0 0.0
          %938 = vmatprep.subr.mxu0 0.0
          %939 = vmatpush2.msra.mxu0 0.0
          %940 = vmatprep.subr.mxu0 0.0
          %941 = vmatpush2.msra.mxu0 0.0
          %942 = vmatprep.subr.mxu0 0.0
          %943 = vmatpush2.msra.mxu0 0.0
          %944 = vmatprep.mubr.f32.mxu0 0.0
          %945 = vmatmul.mubr.f32.gmra.mxu0 %v878
          %v946 = vpop.f32.mrf.mxu0
          %v947 = vadd.f32 %v874, %v946
          %v948 = vpop.f32.mrf.mxu0
          %949 = vdwg.mxu0
          %v950 = vadd.f32 %v869, %v947
          %v951 = vxor.u32 %v950, 2147483648
          %v952 = vmul.f32 %v951, 1.442695
          %v953 = vpow.pop %v952
          %v954 = vadd.f32 %v953, 1.0
          %v955 = vrcp.pop %v954
          %v956 = vmul.f32 1.0, %v955
          %958 = vrot.lane.b32.xlu0 %v947, 64
          %v959 = vpop.permute.xlu0 %958
          %v961 = vmul.f32 %v956, %v959
          %963 = vrot.lane.b32.xlu0 %v961, 64
          %v964 = vpop.permute.xlu0 %963
          %v966 = vadd.f32 %v869, %v964
          %v967 = vtanh.pop %v966
          %v968 = vsub.f32 1.0, %v956
          %970 = vrot.lane.b32.xlu0 %v967, 96
          %v971 = vpop.permute.xlu0 %970
          %v973 = vmul.f32 %v968, %v971
          %974 = vrot.lane.b32.xlu0 %v867, 32
          %v975 = vpop.permute.xlu0 %974
          %v977 = vmul.f32 %v956, %v975
          %v978 = vadd.f32 %v973, %v977
          %980 = vrot.lane.b32.xlu0 %v978, 96
          %v981 = vpop.permute.xlu0 %980
          %s983 = scalar_lea.vmem %s373, 6 [#allocation9]
          %vm984 = vcmask 254976
          %985 = vst.msk [vmem:[%s983] sm:$0x3] %vm984, %v981
          %s986 = scalar_lea.vmem %s319, 4 [#allocation3]
          %v987 = vld [vmem:[%s986] sm:$0x3]
          %v988 = vsel %vm876, %v981, 0
          %990 = vmatprep.subr.mxu0 0.0
          %991 = vmatpush1.msra.mxu0 0.0
          %992 = vmatprep.subr.mxu0 0.0
          %993 = vmatpush1.msra.mxu0 0.0
          %994 = vmatprep.subr.mxu0 0.0
          %995 = vmatpush1.msra.mxu0 0.0
          %996 = vmatprep.subr.mxu0 0.0
          %997 = vmatpush1.msra.mxu0 0.0
          %998 = vmatprep.subr.mxu0 0.0
          %999 = vmatpush1.msra.mxu0 0.0
          %1000 = vmatprep.subr.mxu0 0.0
          %1001 = vmatpush1.msra.mxu0 0.0
          %1002 = vmatprep.subr.mxu0 0.0
          %1003 = vmatpush1.msra.mxu0 0.0
          %1004 = vmatprep.subr.mxu0 0.0
          %1005 = vmatpush1.msra.mxu0 0.0
          %1006 = vmatprep.subr.mxu0 0.0
          %1007 = vmatpush1.msra.mxu0 0.0
          %1008 = vmatprep.subr.mxu0 0.0
          %1009 = vmatpush1.msra.mxu0 0.0
          %1010 = vmatprep.subr.mxu0 0.0
          %1011 = vmatpush1.msra.mxu0 0.0
          %1012 = vmatprep.subr.mxu0 0.0
          %1013 = vmatpush1.msra.mxu0 0.0
          %1014 = vmatprep.subr.mxu0 0.0
          %1015 = vmatpush1.msra.mxu0 %v400
          %1016 = vmatprep.subr.mxu0 0.0
          %1017 = vmatpush1.msra.mxu0 %v399
          %1018 = vmatprep.subr.mxu0 0.0
          %1019 = vmatpush1.msra.mxu0 %v398
          %1020 = vmatprep.subr.mxu0 0.0
          %1021 = vmatpush1.msra.mxu0 %v397
          %1022 = vmatprep.subr.mxu0 0.0
          %1023 = vmatpush2.msra.mxu0 0.0
          %1024 = vmatprep.subr.mxu0 0.0
          %1025 = vmatpush2.msra.mxu0 0.0
          %1026 = vmatprep.subr.mxu0 0.0
          %1027 = vmatpush2.msra.mxu0 0.0
          %1028 = vmatprep.subr.mxu0 0.0
          %1029 = vmatpush2.msra.mxu0 0.0
          %1030 = vmatprep.subr.mxu0 0.0
          %1031 = vmatpush2.msra.mxu0 0.0
          %1032 = vmatprep.subr.mxu0 0.0
          %1033 = vmatpush2.msra.mxu0 0.0
          %1034 = vmatprep.subr.mxu0 0.0
          %1035 = vmatpush2.msra.mxu0 0.0
          %1036 = vmatprep.subr.mxu0 0.0
          %1037 = vmatpush2.msra.mxu0 0.0
          %1038 = vmatprep.subr.mxu0 0.0
          %1039 = vmatpush2.msra.mxu0 0.0
          %1040 = vmatprep.subr.mxu0 0.0
          %1041 = vmatpush2.msra.mxu0 0.0
          %1042 = vmatprep.subr.mxu0 0.0
          %1043 = vmatpush2.msra.mxu0 0.0
          %1044 = vmatprep.subr.mxu0 0.0
          %1045 = vmatpush2.msra.mxu0 0.0
          %1046 = vmatprep.subr.mxu0 0.0
          %1047 = vmatpush2.msra.mxu0 0.0
          %1048 = vmatprep.subr.mxu0 0.0
          %1049 = vmatpush2.msra.mxu0 0.0
          %1050 = vmatprep.subr.mxu0 0.0
          %1051 = vmatpush2.msra.mxu0 0.0
          %1052 = vmatprep.subr.mxu0 0.0
          %1053 = vmatpush2.msra.mxu0 0.0
          %1054 = vmatprep.mubr.f32.mxu0 0.0
          %1055 = vmatmul.mubr.f32.gmra.mxu0 %v988
          %v1056 = vpop.f32.mrf.mxu0
          %v1057 = vadd.f32 %v874, %v1056
          %v1058 = vpop.f32.mrf.mxu0
          %1059 = vdwg.mxu0
          %v1060 = vadd.f32 %v987, %v1057
          %v1061 = vxor.u32 %v1060, 2147483648
          %v1062 = vmul.f32 %v1061, 1.442695
          %v1063 = vpow.pop %v1062
          %v1064 = vadd.f32 %v1063, 1.0
          %v1065 = vrcp.pop %v1064
          %v1066 = vmul.f32 1.0, %v1065
          %1068 = vrot.lane.b32.xlu0 %v1057, 64
          %v1069 = vpop.permute.xlu0 %1068
          %v1071 = vmul.f32 %v1066, %v1069
          %1073 = vrot.lane.b32.xlu0 %v1071, 64
          %v1074 = vpop.permute.xlu0 %1073
          %v1076 = vadd.f32 %v987, %v1074
          %v1077 = vtanh.pop %v1076
          %v1078 = vsub.f32 1.0, %v1066
          %1080 = vrot.lane.b32.xlu0 %v1077, 96
          %v1081 = vpop.permute.xlu0 %1080
          %v1083 = vmul.f32 %v1078, %v1081
          %v1084 = vmul.f32 %v1066, %v978
          %v1085 = vadd.f32 %v1083, %v1084
          %1087 = vrot.lane.b32.xlu0 %v1085, 96
          %v1088 = vpop.permute.xlu0 %1087
          %s1090 = scalar_lea.vmem %s373, 4 [#allocation9]
          %1091 = vst.msk [vmem:[%s1090] sm:$0x3] %vm984, %v1088
          %s1092 = scalar_lea.vmem %s319, 2 [#allocation3]
          %v1093 = vld [vmem:[%s1092] sm:$0x3]
          %v1094 = vsel %vm876, %v1088, 0
          %1096 = vmatprep.subr.mxu0 0.0
          %1097 = vmatpush1.msra.mxu0 0.0
          %1098 = vmatprep.subr.mxu0 0.0
          %1099 = vmatpush1.msra.mxu0 0.0
          %1100 = vmatprep.subr.mxu0 0.0
          %1101 = vmatpush1.msra.mxu0 0.0
          %1102 = vmatprep.subr.mxu0 0.0
          %1103 = vmatpush1.msra.mxu0 0.0
          %1104 = vmatprep.subr.mxu0 0.0
          %1105 = vmatpush1.msra.mxu0 0.0
          %1106 = vmatprep.subr.mxu0 0.0
          %1107 = vmatpush1.msra.mxu0 0.0
          %1108 = vmatprep.subr.mxu0 0.0
          %1109 = vmatpush1.msra.mxu0 0.0
          %1110 = vmatprep.subr.mxu0 0.0
          %1111 = vmatpush1.msra.mxu0 0.0
          %1112 = vmatprep.subr.mxu0 0.0
          %1113 = vmatpush1.msra.mxu0 0.0
          %1114 = vmatprep.subr.mxu0 0.0
          %1115 = vmatpush1.msra.mxu0 0.0
          %1116 = vmatprep.subr.mxu0 0.0
          %1117 = vmatpush1.msra.mxu0 0.0
          %1118 = vmatprep.subr.mxu0 0.0
          %1119 = vmatpush1.msra.mxu0 0.0
          %1120 = vmatprep.subr.mxu0 0.0
          %1121 = vmatpush1.msra.mxu0 %v400
          %1122 = vmatprep.subr.mxu0 0.0
          %1123 = vmatpush1.msra.mxu0 %v399
          %1124 = vmatprep.subr.mxu0 0.0
          %1125 = vmatpush1.msra.mxu0 %v398
          %1126 = vmatprep.subr.mxu0 0.0
          %1127 = vmatpush1.msra.mxu0 %v397
          %1128 = vmatprep.subr.mxu0 0.0
          %1129 = vmatpush2.msra.mxu0 0.0
          %1130 = vmatprep.subr.mxu0 0.0
          %1131 = vmatpush2.msra.mxu0 0.0
          %1132 = vmatprep.subr.mxu0 0.0
          %1133 = vmatpush2.msra.mxu0 0.0
          %1134 = vmatprep.subr.mxu0 0.0
          %1135 = vmatpush2.msra.mxu0 0.0
          %1136 = vmatprep.subr.mxu0 0.0
          %1137 = vmatpush2.msra.mxu0 0.0
          %1138 = vmatprep.subr.mxu0 0.0
          %1139 = vmatpush2.msra.mxu0 0.0
          %1140 = vmatprep.subr.mxu0 0.0
          %1141 = vmatpush2.msra.mxu0 0.0
          %1142 = vmatprep.subr.mxu0 0.0
          %1143 = vmatpush2.msra.mxu0 0.0
          %1144 = vmatprep.subr.mxu0 0.0
          %1145 = vmatpush2.msra.mxu0 0.0
          %1146 = vmatprep.subr.mxu0 0.0
          %1147 = vmatpush2.msra.mxu0 0.0
          %1148 = vmatprep.subr.mxu0 0.0
          %1149 = vmatpush2.msra.mxu0 0.0
          %1150 = vmatprep.subr.mxu0 0.0
          %1151 = vmatpush2.msra.mxu0 0.0
          %1152 = vmatprep.subr.mxu0 0.0
          %1153 = vmatpush2.msra.mxu0 0.0
          %1154 = vmatprep.subr.mxu0 0.0
          %1155 = vmatpush2.msra.mxu0 0.0
          %1156 = vmatprep.subr.mxu0 0.0
          %1157 = vmatpush2.msra.mxu0 0.0
          %1158 = vmatprep.subr.mxu0 0.0
          %1159 = vmatpush2.msra.mxu0 0.0
          %1160 = vmatprep.mubr.f32.mxu0 0.0
          %1161 = vmatmul.mubr.f32.gmra.mxu0 %v1094
          %v1162 = vpop.f32.mrf.mxu0
          %v1163 = vadd.f32 %v874, %v1162
          %v1164 = vpop.f32.mrf.mxu0
          %1165 = vdwg.mxu0
          %v1166 = vadd.f32 %v1093, %v1163
          %v1167 = vxor.u32 %v1166, 2147483648
          %v1168 = vmul.f32 %v1167, 1.442695
          %v1169 = vpow.pop %v1168
          %v1170 = vadd.f32 %v1169, 1.0
          %v1171 = vrcp.pop %v1170
          %v1172 = vmul.f32 1.0, %v1171
          %1174 = vrot.lane.b32.xlu0 %v1163, 64
          %v1175 = vpop.permute.xlu0 %1174
          %v1177 = vmul.f32 %v1172, %v1175
          %1179 = vrot.lane.b32.xlu0 %v1177, 64
          %v1180 = vpop.permute.xlu0 %1179
          %v1182 = vadd.f32 %v1093, %v1180
          %v1183 = vtanh.pop %v1182
          %v1184 = vsub.f32 1.0, %v1172
          %1186 = vrot.lane.b32.xlu0 %v1183, 96
          %v1187 = vpop.permute.xlu0 %1186
          %v1189 = vmul.f32 %v1184, %v1187
          %v1190 = vmul.f32 %v1172, %v1085
          %v1191 = vadd.f32 %v1189, %v1190
          %1193 = vrot.lane.b32.xlu0 %v1191, 96
          %v1194 = vpop.permute.xlu0 %1193
          %s1196 = scalar_lea.vmem %s373, 2 [#allocation9]
          %1197 = vst.msk [vmem:[%s1196] sm:$0x3] %vm984, %v1194
          %v1198 = vld [vmem:[%s319] sm:$0x3]
          %v1199 = vsel %vm876, %v1194, 0
          %1201 = vmatprep.subr.mxu0 0.0
          %1202 = vmatpush1.msra.mxu0 0.0
          %1203 = vmatprep.subr.mxu0 0.0
          %1204 = vmatpush1.msra.mxu0 0.0
          %1205 = vmatprep.subr.mxu0 0.0
          %1206 = vmatpush1.msra.mxu0 0.0
          %1207 = vmatprep.subr.mxu0 0.0
          %1208 = vmatpush1.msra.mxu0 0.0
          %1209 = vmatprep.subr.mxu0 0.0
          %1210 = vmatpush1.msra.mxu0 0.0
          %1211 = vmatprep.subr.mxu0 0.0
          %1212 = vmatpush1.msra.mxu0 0.0
          %1213 = vmatprep.subr.mxu0 0.0
          %1214 = vmatpush1.msra.mxu0 0.0
          %1215 = vmatprep.subr.mxu0 0.0
          %1216 = vmatpush1.msra.mxu0 0.0
          %1217 = vmatprep.subr.mxu0 0.0
          %1218 = vmatpush1.msra.mxu0 0.0
          %1219 = vmatprep.subr.mxu0 0.0
          %1220 = vmatpush1.msra.mxu0 0.0
          %1221 = vmatprep.subr.mxu0 0.0
          %1222 = vmatpush1.msra.mxu0 0.0
          %1223 = vmatprep.subr.mxu0 0.0
          %1224 = vmatpush1.msra.mxu0 0.0
          %1225 = vmatprep.subr.mxu0 0.0
          %1226 = vmatpush1.msra.mxu0 %v400
          %1227 = vmatprep.subr.mxu0 0.0
          %1228 = vmatpush1.msra.mxu0 %v399
          %1229 = vmatprep.subr.mxu0 0.0
          %1230 = vmatpush1.msra.mxu0 %v398
          %1231 = vmatprep.subr.mxu0 0.0
          %1232 = vmatpush1.msra.mxu0 %v397
          %1233 = vmatprep.subr.mxu0 0.0
          %1234 = vmatpush2.msra.mxu0 0.0
          %1235 = vmatprep.subr.mxu0 0.0
          %1236 = vmatpush2.msra.mxu0 0.0
          %1237 = vmatprep.subr.mxu0 0.0
          %1238 = vmatpush2.msra.mxu0 0.0
          %1239 = vmatprep.subr.mxu0 0.0
          %1240 = vmatpush2.msra.mxu0 0.0
          %1241 = vmatprep.subr.mxu0 0.0
          %1242 = vmatpush2.msra.mxu0 0.0
          %1243 = vmatprep.subr.mxu0 0.0
          %1244 = vmatpush2.msra.mxu0 0.0
          %1245 = vmatprep.subr.mxu0 0.0
          %1246 = vmatpush2.msra.mxu0 0.0
          %1247 = vmatprep.subr.mxu0 0.0
          %1248 = vmatpush2.msra.mxu0 0.0
          %1249 = vmatprep.subr.mxu0 0.0
          %1250 = vmatpush2.msra.mxu0 0.0
          %1251 = vmatprep.subr.mxu0 0.0
          %1252 = vmatpush2.msra.mxu0 0.0
          %1253 = vmatprep.subr.mxu0 0.0
          %1254 = vmatpush2.msra.mxu0 0.0
          %1255 = vmatprep.subr.mxu0 0.0
          %1256 = vmatpush2.msra.mxu0 0.0
          %1257 = vmatprep.subr.mxu0 0.0
          %1258 = vmatpush2.msra.mxu0 0.0
          %1259 = vmatprep.subr.mxu0 0.0
          %1260 = vmatpush2.msra.mxu0 0.0
          %1261 = vmatprep.subr.mxu0 0.0
          %1262 = vmatpush2.msra.mxu0 0.0
          %1263 = vmatprep.subr.mxu0 0.0
          %1264 = vmatpush2.msra.mxu0 0.0
          %1265 = vmatprep.mubr.f32.mxu0 0.0
          %1266 = vmatmul.mubr.f32.gmra.mxu0 %v1199
          %v1267 = vpop.f32.mrf.mxu0
          %v1268 = vadd.f32 %v874, %v1267
          %v1269 = vpop.f32.mrf.mxu0
          %1270 = vdwg.mxu0
          %v1271 = vadd.f32 %v1198, %v1268
          %v1272 = vxor.u32 %v1271, 2147483648
          %v1273 = vmul.f32 %v1272, 1.442695
          %v1274 = vpow.pop %v1273
          %v1275 = vadd.f32 %v1274, 1.0
          %v1276 = vrcp.pop %v1275
          %v1277 = vmul.f32 1.0, %v1276
          %1279 = vrot.lane.b32.xlu0 %v1268, 64
          %v1280 = vpop.permute.xlu0 %1279
          %v1282 = vmul.f32 %v1277, %v1280
          %1284 = vrot.lane.b32.xlu0 %v1282, 64
          %v1285 = vpop.permute.xlu0 %1284
          %v1287 = vadd.f32 %v1198, %v1285
          %v1288 = vtanh.pop %v1287
          %v1289 = vsub.f32 1.0, %v1277
          %1291 = vrot.lane.b32.xlu0 %v1288, 96
          %v1292 = vpop.permute.xlu0 %1291
          %v1294 = vmul.f32 %v1289, %v1292
          %v1295 = vmul.f32 %v1277, %v1191
          %v1296 = vadd.f32 %v1294, %v1295
          %1298 = vrot.lane.b32.xlu0 %v1296, 96
          %v1299 = vpop.permute.xlu0 %1298
          %1301 = vst.msk [vmem:[%s373] sm:$0x3] %vm984, %v1299
          %1302 = vst.msk [vmem:[%s866] sm:$0x3] %vm984, %v1299
          %p1303 = scmp.eq.s32.totalorder %s34, 1
          // Predicated region
          $region69: #{tpu_custom_call.1} parent=63 // pred_check
            %p1304 = pneg %p1303
          $region70: #{tpu_custom_call.1} parent=63 // pred_check_branch
            %1306 = sbr.rel (%p1304) target = $region72
          $region71: #{tpu_custom_call.1} parent=63 // pred_region
            %1307 = vst.msk [vmem:[%s380] sm:$0x3] %vm984, %v1299
          $region72: #{tpu_custom_call.1} parent=63 // pred_fallthru
            _
        $region64: #{tpu_custom_call.1} parent=35 // pred_fallthru
          _
        %s1308 = sand.u32 %s177, 1
        %s1309 = scalar_lea.sflag [#allocation5], %s1308
        %s1310 = sand.u32 %s177, 1
        %s1311 = smul.addr %s1310, 8
        %s1312 = scalar_lea.vmem [#allocation9], %s1311
        %s1313 = sand.u32 %s203, 1
        %s1314 = scalar_lea.sflag [#allocation11], %s1313
        %s1315 = sand.u32 %s203, 1
        %s1316 = smul.addr %s1315, 2
        %s1317 = scalar_lea.vmem [#allocation10], %s1316
        // Predicated region
        $region73: #{tpu_custom_call.1} parent=35 // pred_check
          %p1318 = pneg %p187
        $region74: #{tpu_custom_call.1} parent=35 // pred_check_branch
          %1320 = sbr.rel (%p1318) target = $region76
        $region75: #{tpu_custom_call.1} parent=35 // pred_region
          %s1321 = ssub.s32 1, %s33
          %s1322 = smul.u32 %s34, %s1321
          %s1323 = ssub.s32 1, %s34
          %s1324 = smul.u32 %s1323, %s33
          %s1325 = sadd.s32 %s1322, %s1324
          %s1326 = smul.u32 4, %s1325
          %s1328 = ssub.s32 128, 128
          %1329 = vsyncadd %s1309, %s1328
          %s1330 = smul.addr %s33, 8
          %s1331 = sadd.s32 %s1326, %s1330
          %s1332 = smul.addr %s1331, 32
          %s1333 = scalar_lea.hbm %s4, %s1332
          %s1334 = sshll.u32 %s1312, 4
          %s1335 = int_to_ptr.vmem [resolvable:$true] %s1334
          %1340 = dma.vmem_to_hbm [thread:$0]  %s1335, 128, %s1333, %s1309, 32, 32, 2
        $region76: #{tpu_custom_call.1} parent=35 // pred_fallthru
          _
        // Predicated region
        $region77: #{tpu_custom_call.1} parent=35 // pred_check
          %p1341 = pneg %p213
        $region78: #{tpu_custom_call.1} parent=35 // pred_check_branch
          %1343 = sbr.rel (%p1341) target = $region80
        $region79: #{tpu_custom_call.1} parent=35 // pred_region
          %s1345 = ssub.s32 32, 32
          %1346 = vsyncadd %s1314, %s1345
          %s1347 = smul.addr %s33, 32
          %s1348 = scalar_lea.hbm %s5, %s1347
          %s1350 = sshll.u32 %s1317, 4
          %s1351 = int_to_ptr.vmem [resolvable:$true] %s1350
          %1353 = dma.vmem_to_hbm [thread:$0]  %s1351, 32, %s1348, %s1314
        $region80: #{tpu_custom_call.1} parent=35 // pred_fallthru
          _
      $region36: #{tpu_custom_call.1} parent=5 // pred_fallthru
        _
      %p1354 = scmp.le.s32.totalorder 2, %s24
      // Predicated region
      $region81: #{tpu_custom_call.1} parent=5 // pred_check
        %p1355 = pneg %p1354
      $region82: #{tpu_custom_call.1} parent=5 // pred_check_branch
        %1357 = sbr.rel (%p1355) target = $region84
      $region83: #{tpu_custom_call.1} parent=5 // pred_region
        %s1358 = ssub.s32 %s24, 2
        // Predicated region
        $region85: #{tpu_custom_call.1} parent=83 // pred_check
          %p1359 = pneg %p193
        $region86: #{tpu_custom_call.1} parent=83 // pred_check_branch
          %1361 = sbr.rel (%p1359) target = $region88
        $region87: #{tpu_custom_call.1} parent=83 // pred_region
          %s1362 = sand.u32 %s178, 1
          %s1363 = scalar_lea.sflag [#allocation5], %s1362
          %s1364 = sand.u32 %s178, 1
          %s1365 = smul.addr %s1364, 8
          %s1366 = scalar_lea.vmem [#allocation9], %s1365
          %1367 = dma.done %s1363, 128
        $region88: #{tpu_custom_call.1} parent=83 // pred_fallthru
          _
        // Predicated region
        $region89: #{tpu_custom_call.1} parent=83 // pred_check
          %p1368 = pneg %p219
        $region90: #{tpu_custom_call.1} parent=83 // pred_check_branch
          %1370 = sbr.rel (%p1368) target = $region92
        $region91: #{tpu_custom_call.1} parent=83 // pred_region
          %s1371 = sand.u32 %s204, 1
          %s1372 = scalar_lea.sflag [#allocation11], %s1371
          %s1373 = sand.u32 %s204, 1
          %s1374 = smul.addr %s1373, 2
          %s1375 = scalar_lea.vmem [#allocation10], %s1374
          %1376 = dma.done %s1372, 32
        $region92: #{tpu_custom_call.1} parent=83 // pred_fallthru
          _
      $region84: #{tpu_custom_call.1} parent=5 // pred_fallthru
        _
    $region6: #{tpu_custom_call.1} parent=1 // loop_footer
      %s28 = sadd.s32 1, %s24
    $region7: #{tpu_custom_call.1} parent=1 // loop_footer_branch
      %23 = sbr.rel target = $region3
    $region8: #{tpu_custom_call.1} parent=1 // loop_exit
      _
    %1377 = vsyncpa [#allocation4], 1
    %s1378 = scalar_lea.sflag [#allocation4], 1
    %1379 = vsyncpa %s1378, 1
    %1380 = vsyncpa [#allocation7], 1
    %s1381 = scalar_lea.sflag [#allocation7], 1
    %1382 = vsyncpa %s1381, 1
    %1383 = vsyncpa [#allocation5], 1
    %s1384 = scalar_lea.sflag [#allocation5], 1
    %1385 = vsyncpa %s1384, 1
    %1386 = vsyncpa [#allocation11], 1
    %s1387 = scalar_lea.sflag [#allocation11], 1
    %1388 = vsyncpa %s1387, 1

</llo_original>
